<compile_context>
chip_gen: v7x
topology: tpu7x:2x2x1
jax: 0.10.0
libtpu: 0.0.40
codegen_flags: <defaults>
</compile_context>

<pallas_src>
import jax
import jax.numpy as jnp
from jax import lax
from jax.experimental import pallas as pl
from jax.experimental.pallas import tpu as pltpu


def _round_up(x: int, m: int) -> int:
    return ((x + m - 1) // m) * m


def lstm_last_linear_kernel(x_ref, wih_ref, whh_ref, b_ref, wout_ref, bout_ref,
                            out_ref, gx_ref):
    """One batch-block: full LSTM recurrence + final Linear.

    Shapes (all padded/aligned by the wrapper):
      x_ref    : (S, Bb, I_pad)      compute dtype (f32 or bf16)
      wih_ref  : (I_pad, 4*H_pad)    compute dtype
      whh_ref  : (H_pad, 4*H_pad)    compute dtype
      b_ref    : (1, 4*H_pad)        f32 (b_ih + b_hh, gate-block aligned)
      wout_ref : (H_pad, O_pad)      compute dtype
      bout_ref : (1, O_pad)          f32
      out_ref  : (Bb, O_pad)         f32
      gx_ref   : (S*Bb, 4*H_pad)     f32 VMEM scratch (precomputed input gates)
    """
    S, Bb, I_pad = x_ref.shape
    H_pad = whh_ref.shape[0]

    # ---- Hoisted input projection: one big MXU matmul for every timestep. ----
    x2d = x_ref[...].reshape(S * Bb, I_pad)          # layout no-op (Bb % 8 == 0)
    gx_ref[...] = (
        jnp.dot(x2d, wih_ref[...], preferred_element_type=jnp.float32)
        + b_ref[...]
    )

    def sigmoid(v):  # EUP-friendly: a single tanh instead of exp + divide
        return 0.5 * jnp.tanh(0.5 * v) + 0.5

    def step(t, carry):
        h, c = carry                                      # f32 state
        gx_t = gx_ref[pl.ds(t * Bb, Bb), :]               # (Bb, 4*H_pad)
        gates = gx_t + jnp.dot(
            h.astype(whh_ref.dtype), whh_ref[...],
            preferred_element_type=jnp.float32)
        # Gate order i, f, g, o (PyTorch), each on its own 128-aligned block.
        i_g = sigmoid(gates[:, 0 * H_pad:1 * H_pad])
        f_g = sigmoid(gates[:, 1 * H_pad:2 * H_pad])
        g_g = jnp.tanh(gates[:, 2 * H_pad:3 * H_pad])
        o_g = sigmoid(gates[:, 3 * H_pad:4 * H_pad])
        c_new = f_g * c + i_g * g_g
        h_new = o_g * jnp.tanh(c_new)
        return h_new, c_new

    h0 = jnp.zeros((Bb, H_pad), jnp.float32)
    c0 = jnp.zeros((Bb, H_pad), jnp.float32)
    unroll = True if S <= 32 else 8
    h, _ = lax.fori_loop(0, S, step, (h0, c0), unroll=unroll)

    # ---- Output Linear on the last timestep's hidden state. ----
    out = (jnp.dot(h.astype(wout_ref.dtype), wout_ref[...],
                   preferred_element_type=jnp.float32)
           + bout_ref[...])
    out_ref[...] = out.astype(out_ref.dtype)


def lstm_model_forward(inputs, w_ih, w_hh, b_ih, b_hh, w_out, b_out,
                       *, weight_dtype=jnp.float32, batch_block=None):
    """inputs: (seq_len, batch, input_dim). Returns (batch, output_dim).

    weight_dtype=jnp.bfloat16 casts weights + activations feeding the MXU to
    bf16 (f32 accumulation, f32 state/elementwise) — preferable on v6e/v7x.
    """
    seq_len, batch, input_dim = inputs.shape
    hidden_dim = w_hh.shape[1]
    output_dim = w_out.shape[0]
    f32 = jnp.float32

    # ---- Padded, (8,128)-aligned device shapes. ----
    I_pad = _round_up(input_dim, 128)
    H_pad = _round_up(hidden_dim, 128)
    O_pad = _round_up(output_dim, 128)
    B_pad = max(_round_up(batch, 8), 8)

    if batch_block is None:
        batch_block = B_pad if B_pad <= 128 else 128
    batch_block = _round_up(batch_block, 8)
    B_pad = _round_up(B_pad, batch_block)
    num_b_blocks = B_pad // batch_block

    # ---- Gate-block-aligned weight layout: gate k lives in columns
    #      [k*H_pad, k*H_pad + hidden_dim) so kernel slices are lane-aligned. ----
    wih_t = jnp.zeros((I_pad, 4 * H_pad), f32)
    whh_t = jnp.zeros((H_pad, 4 * H_pad), f32)
    bias = jnp.zeros((1, 4 * H_pad), f32)
    b_sum = (b_ih + b_hh).astype(f32)
    wih_T = w_ih.T.astype(f32)   # (input_dim, 4*hidden_dim), gate order i,f,g,o
    whh_T = w_hh.T.astype(f32)   # (hidden_dim, 4*hidden_dim)
    for k in range(4):
        src = slice(k * hidden_dim, (k + 1) * hidden_dim)
        dst = slice(k * H_pad, k * H_pad + hidden_dim)
        wih_t = wih_t.at[:input_dim, dst].set(wih_T[:, src])
        whh_t = whh_t.at[:hidden_dim, dst].set(whh_T[:, src])
        bias = bias.at[0, dst].set(b_sum[src])

    wout_t = jnp.zeros((H_pad, O_pad), f32).at[:hidden_dim, :output_dim].set(
        w_out.T.astype(f32))
    bout = jnp.zeros((1, O_pad), f32).at[0, :output_dim].set(b_out.astype(f32))

    x_p = jnp.zeros((seq_len, B_pad, I_pad), f32).at[
        :, :batch, :input_dim].set(inputs.astype(f32))

    # MXU-feeding operands in the compute dtype; biases / state stay f32.
    cdt = weight_dtype
    x_p = x_p.astype(cdt)
    wih_t = wih_t.astype(cdt)
    whh_t = whh_t.astype(cdt)
    wout_t = wout_t.astype(cdt)

    grid_spec = pltpu.PrefetchScalarGridSpec(
        num_scalar_prefetch=0,
        grid=(num_b_blocks,),                       # batch blocks are independent
        in_specs=[
            pl.BlockSpec((seq_len, batch_block, I_pad), lambda b: (0, b, 0)),
            pl.BlockSpec((I_pad, 4 * H_pad), lambda b: (0, 0)),
            pl.BlockSpec((H_pad, 4 * H_pad), lambda b: (0, 0)),
            pl.BlockSpec((1, 4 * H_pad), lambda b: (0, 0)),
            pl.BlockSpec((H_pad, O_pad), lambda b: (0, 0)),
            pl.BlockSpec((1, O_pad), lambda b: (0, 0)),
        ],
        out_specs=pl.BlockSpec((batch_block, O_pad), lambda b: (b, 0)),
        scratch_shapes=[
            # Precomputed input-projection gates for every timestep of the block.
            pltpu.VMEM((seq_len * batch_block, 4 * H_pad), jnp.float32),
        ],
    )

    out_p = pl.pallas_call(
        lstm_last_linear_kernel,
        out_shape=jax.ShapeDtypeStruct((B_pad, O_pad), jnp.float32),
        grid_spec=grid_spec,
        compiler_params=pltpu.CompilerParams(
            dimension_semantics=("parallel",),      # shard batch blocks over TCs
            vmem_limit_bytes=32 * 1024 * 1024,      # safe on v5e/v6e/v7x
        ),
    )(x_p, wih_t, whh_t, bias, wout_t, bout)

    return out_p[:batch, :output_dim].astype(inputs.dtype)


def reference_forward(inputs, w_ih, w_hh, b_ih, b_hh, w_out, b_out):
    """Pure-JAX reference matching nn.LSTM (hidden0=None) + Linear(last step)."""
    _, batch, _ = inputs.shape
    hidden_dim = w_hh.shape[1]
    h = jnp.zeros((batch, hidden_dim), jnp.float32)
    c = jnp.zeros((batch, hidden_dim), jnp.float32)

    def step(carry, x_t):
        h, c = carry
        gates = x_t @ w_ih.T + h @ w_hh.T + b_ih + b_hh
        i, f, g, o = jnp.split(gates, 4, axis=-1)
        i, f, o = jax.nn.sigmoid(i), jax.nn.sigmoid(f), jax.nn.sigmoid(o)
        g = jnp.tanh(g)
        c = f * c + i * g
        h = o * jnp.tanh(c)
        return (h, c), None

    (h, _), _ = lax.scan(step, (h, c), inputs)
    return h @ w_out.T + b_out


if __name__ == "__main__":
    # Small shapes consistent with the module.
    seq_len, batch = 8, 4
    input_dim, hidden_dim, output_dim = 8, 16, 8

    key = jax.random.PRNGKey(0)
    keys = jax.random.split(key, 7)
    scale = float(hidden_dim) ** -0.5  # PyTorch LSTM/Linear uniform init range

    inputs = jax.random.normal(keys[0], (seq_len, batch, input_dim), jnp.float32)
    w_ih = jax.random.uniform(keys[1], (4 * hidden_dim, input_dim), jnp.float32, -scale, scale)
    w_hh = jax.random.uniform(keys[2], (4 * hidden_dim, hidden_dim), jnp.float32, -scale, scale)
    b_ih = jax.random.uniform(keys[3], (4 * hidden_dim,), jnp.float32, -scale, scale)
    b_hh = jax.random.uniform(keys[4], (4 * hidden_dim,), jnp.float32, -scale, scale)
    w_out = jax.random.uniform(keys[5], (output_dim, hidden_dim), jnp.float32, -scale, scale)
    b_out = jax.random.uniform(keys[6], (output_dim,), jnp.float32, -scale, scale)

    ref = reference_forward(inputs, w_ih, w_hh, b_ih, b_hh, w_out, b_out)

    # f32 path (exact semantics).
    out = lstm_model_forward(inputs, w_ih, w_hh, b_ih, b_hh, w_out, b_out)
    out = jax.block_until_ready(out)
    assert out.shape == (batch, output_dim)
    assert jnp.allclose(out, ref, atol=1e-4, rtol=1e-4), "f32 mismatch vs reference"

    # bf16-weight path (v6e/v7x MXU optimization); looser tolerance.
    out_bf16 = lstm_model_forward(inputs, w_ih, w_hh, b_ih, b_hh, w_out, b_out,
                                  weight_dtype=jnp.bfloat16)
    out_bf16 = jax.block_until_ready(out_bf16)
    assert jnp.allclose(out_bf16, ref, atol=1e-1, rtol=1e-1), "bf16 mismatch vs reference"

    print("KERNEL_OK")
</pallas_src>

<mosaic_0001>
module attributes {stable_mosaic.version = 11 : i64} {
  func.func @lstm_last_linear_kernel(%arg0: i32, %arg1: memref<8x8x128xf32, #tpu.memory_space<vmem>>, %arg2: memref<128x512xf32, #tpu.memory_space<vmem>>, %arg3: memref<128x512xf32, #tpu.memory_space<vmem>>, %arg4: memref<1x512xf32, #tpu.memory_space<vmem>>, %arg5: memref<128x128xf32, #tpu.memory_space<vmem>>, %arg6: memref<1x128xf32, #tpu.memory_space<vmem>>, %arg7: memref<8x128xf32, #tpu.memory_space<vmem>>, %arg8: memref<64x512xf32, #tpu.memory_space<vmem>>) attributes {dimension_semantics = [#tpu.dimension_semantics<parallel>], iteration_bounds = array<i64: 1>, scalar_prefetch = 0 : i64, scratch_operands = 1 : i64, tpu.core_type = #tpu.core_type<tc>, window_params = [{transform_indices = @transform_0, window_bounds = array<i64: 8, 8, 128>}, {pipeline_mode = #tpu.pipeline_mode<synchronous>, transform_indices = @transform_1, window_bounds = array<i64: 128, 512>}, {pipeline_mode = #tpu.pipeline_mode<synchronous>, transform_indices = @transform_2, window_bounds = array<i64: 128, 512>}, {pipeline_mode = #tpu.pipeline_mode<synchronous>, transform_indices = @transform_3, window_bounds = array<i64: 1, 512>}, {pipeline_mode = #tpu.pipeline_mode<synchronous>, transform_indices = @transform_4, window_bounds = array<i64: 128, 128>}, {pipeline_mode = #tpu.pipeline_mode<synchronous>, transform_indices = @transform_5, window_bounds = array<i64: 1, 128>}, {transform_indices = @transform_6, window_bounds = array<i64: 8, 128>}]} {
    %c0 = arith.constant 0 : index
    %c0_0 = arith.constant 0 : index
    %c0_1 = arith.constant 0 : index
    %0 = vector.load %arg1[%c0, %c0_0, %c0_1] : memref<8x8x128xf32, #tpu.memory_space<vmem>>, vector<8x8x128xf32>
    %1 = vector.shape_cast %0 : vector<8x8x128xf32> to vector<64x128xf32>
    %c0_2 = arith.constant 0 : index
    %c0_3 = arith.constant 0 : index
    %2 = vector.load %arg2[%c0_2, %c0_3] : memref<128x512xf32, #tpu.memory_space<vmem>>, vector<128x512xf32>
    %cst = arith.constant dense<0.000000e+00> : vector<64x512xf32>
    %3 = tpu.matmul %1, %2, %cst {dimension_numbers = #tpu.dot_dimension_numbers<[1], [0], [0], [1], [0, 0, 1, 1], [], []>} : vector<64x128xf32>, vector<128x512xf32>, vector<64x512xf32> -> vector<64x512xf32>
    %c0_4 = arith.constant 0 : index
    %c0_5 = arith.constant 0 : index
    %4 = vector.load %arg4[%c0_4, %c0_5] : memref<1x512xf32, #tpu.memory_space<vmem>>, vector<1x512xf32>
    %5 = vector.broadcast %4 : vector<1x512xf32> to vector<64x512xf32>
    %6 = arith.addf %3, %5 : vector<64x512xf32>
    %c0_6 = arith.constant 0 : index
    %c0_7 = arith.constant 0 : index
    %7 = vector.load %arg8[%c0_6, %c0_7] : memref<64x512xf32, #tpu.memory_space<vmem>>, vector<64x512xf32>
    tpu.vector_store %arg8[%c0_6, %c0_7], %6 {strides = array<i32>} : memref<64x512xf32, #tpu.memory_space<vmem>>, vector<64x512xf32>,
    %cst_8 = arith.constant 0.000000e+00 : f32
    %8 = vector.broadcast %cst_8 : f32 to vector<8x128xf32>
    %cst_9 = arith.constant 0.000000e+00 : f32
    %9 = vector.broadcast %cst_9 : f32 to vector<8x128xf32>
    %c0_i32 = arith.constant 0 : i32
    %c8_i32 = arith.constant 8 : i32
    %10 = arith.muli %c0_i32, %c8_i32 : i32
    %11 = arith.index_cast %10 : i32 to index
    %c0_10 = arith.constant 0 : index
    %12 = vector.load %arg8[%11, %c0_10] : memref<64x512xf32, #tpu.memory_space<vmem>>, vector<8x512xf32>
    %c0_11 = arith.constant 0 : index
    %c0_12 = arith.constant 0 : index
    %13 = vector.load %arg3[%c0_11, %c0_12] : memref<128x512xf32, #tpu.memory_space<vmem>>, vector<128x512xf32>
    %cst_13 = arith.constant dense<0.000000e+00> : vector<8x512xf32>
    %14 = tpu.matmul %8, %13, %cst_13 {dimension_numbers = #tpu.dot_dimension_numbers<[1], [0], [0], [1], [0, 0, 1, 1], [], []>} : vector<8x128xf32>, vector<128x512xf32>, vector<8x512xf32> -> vector<8x512xf32>
    %15 = arith.addf %12, %14 : vector<8x512xf32>
    %16 = vector.extract_strided_slice %15 {offsets = [0, 0], sizes = [8, 128], strides = [1, 1]} : vector<8x512xf32> to vector<8x128xf32>
    %cst_14 = arith.constant 5.000000e-01 : f32
    %17 = vector.broadcast %cst_14 : f32 to vector<8x128xf32>
    %18 = arith.mulf %17, %16 : vector<8x128xf32>
    %19 = math.tanh %18 : vector<8x128xf32>
    %cst_15 = arith.constant 5.000000e-01 : f32
    %20 = vector.broadcast %cst_15 : f32 to vector<8x128xf32>
    %21 = arith.mulf %20, %19 : vector<8x128xf32>
    %cst_16 = arith.constant 5.000000e-01 : f32
    %22 = vector.broadcast %cst_16 : f32 to vector<8x128xf32>
    %23 = arith.addf %21, %22 : vector<8x128xf32>
    %24 = vector.extract_strided_slice %15 {offsets = [0, 128], sizes = [8, 128], strides = [1, 1]} : vector<8x512xf32> to vector<8x128xf32>
    %cst_17 = arith.constant 5.000000e-01 : f32
    %25 = vector.broadcast %cst_17 : f32 to vector<8x128xf32>
    %26 = arith.mulf %25, %24 : vector<8x128xf32>
    %27 = math.tanh %26 : vector<8x128xf32>
    %cst_18 = arith.constant 5.000000e-01 : f32
    %28 = vector.broadcast %cst_18 : f32 to vector<8x128xf32>
    %29 = arith.mulf %28, %27 : vector<8x128xf32>
    %cst_19 = arith.constant 5.000000e-01 : f32
    %30 = vector.broadcast %cst_19 : f32 to vector<8x128xf32>
    %31 = arith.addf %29, %30 : vector<8x128xf32>
    %32 = vector.extract_strided_slice %15 {offsets = [0, 256], sizes = [8, 128], strides = [1, 1]} : vector<8x512xf32> to vector<8x128xf32>
    %33 = math.tanh %32 : vector<8x128xf32>
    %34 = vector.extract_strided_slice %15 {offsets = [0, 384], sizes = [8, 128], strides = [1, 1]} : vector<8x512xf32> to vector<8x128xf32>
    %cst_20 = arith.constant 5.000000e-01 : f32
    %35 = vector.broadcast %cst_20 : f32 to vector<8x128xf32>
    %36 = arith.mulf %35, %34 : vector<8x128xf32>
    %37 = math.tanh %36 : vector<8x128xf32>
    %cst_21 = arith.constant 5.000000e-01 : f32
    %38 = vector.broadcast %cst_21 : f32 to vector<8x128xf32>
    %39 = arith.mulf %38, %37 : vector<8x128xf32>
    %cst_22 = arith.constant 5.000000e-01 : f32
    %40 = vector.broadcast %cst_22 : f32 to vector<8x128xf32>
    %41 = arith.addf %39, %40 : vector<8x128xf32>
    %42 = arith.mulf %31, %9 : vector<8x128xf32>
    %43 = arith.mulf %23, %33 : vector<8x128xf32>
    %44 = arith.addf %42, %43 : vector<8x128xf32>
    %45 = math.tanh %44 : vector<8x128xf32>
    %46 = arith.mulf %41, %45 : vector<8x128xf32>
    %c1_i32 = arith.constant 1 : i32
    %c8_i32_23 = arith.constant 8 : i32
    %47 = arith.muli %c1_i32, %c8_i32_23 : i32
    %48 = arith.index_cast %47 : i32 to index
    %c0_24 = arith.constant 0 : index
    %49 = vector.load %arg8[%48, %c0_24] : memref<64x512xf32, #tpu.memory_space<vmem>>, vector<8x512xf32>
    %c0_25 = arith.constant 0 : index
    %c0_26 = arith.constant 0 : index
    %50 = vector.load %arg3[%c0_25, %c0_26] : memref<128x512xf32, #tpu.memory_space<vmem>>, vector<128x512xf32>
    %cst_27 = arith.constant dense<0.000000e+00> : vector<8x512xf32>
    %51 = tpu.matmul %46, %50, %cst_27 {dimension_numbers = #tpu.dot_dimension_numbers<[1], [0], [0], [1], [0, 0, 1, 1], [], []>} : vector<8x128xf32>, vector<128x512xf32>, vector<8x512xf32> -> vector<8x512xf32>
    %52 = arith.addf %49, %51 : vector<8x512xf32>
    %53 = vector.extract_strided_slice %52 {offsets = [0, 0], sizes = [8, 128], strides = [1, 1]} : vector<8x512xf32> to vector<8x128xf32>
    %cst_28 = arith.constant 5.000000e-01 : f32
    %54 = vector.broadcast %cst_28 : f32 to vector<8x128xf32>
    %55 = arith.mulf %54, %53 : vector<8x128xf32>
    %56 = math.tanh %55 : vector<8x128xf32>
    %cst_29 = arith.constant 5.000000e-01 : f32
    %57 = vector.broadcast %cst_29 : f32 to vector<8x128xf32>
    %58 = arith.mulf %57, %56 : vector<8x128xf32>
    %cst_30 = arith.constant 5.000000e-01 : f32
    %59 = vector.broadcast %cst_30 : f32 to vector<8x128xf32>
    %60 = arith.addf %58, %59 : vector<8x128xf32>
    %61 = vector.extract_strided_slice %52 {offsets = [0, 128], sizes = [8, 128], strides = [1, 1]} : vector<8x512xf32> to vector<8x128xf32>
    %cst_31 = arith.constant 5.000000e-01 : f32
    %62 = vector.broadcast %cst_31 : f32 to vector<8x128xf32>
    %63 = arith.mulf %62, %61 : vector<8x128xf32>
    %64 = math.tanh %63 : vector<8x128xf32>
    %cst_32 = arith.constant 5.000000e-01 : f32
    %65 = vector.broadcast %cst_32 : f32 to vector<8x128xf32>
    %66 = arith.mulf %65, %64 : vector<8x128xf32>
    %cst_33 = arith.constant 5.000000e-01 : f32
    %67 = vector.broadcast %cst_33 : f32 to vector<8x128xf32>
    %68 = arith.addf %66, %67 : vector<8x128xf32>
    %69 = vector.extract_strided_slice %52 {offsets = [0, 256], sizes = [8, 128], strides = [1, 1]} : vector<8x512xf32> to vector<8x128xf32>
    %70 = math.tanh %69 : vector<8x128xf32>
    %71 = vector.extract_strided_slice %52 {offsets = [0, 384], sizes = [8, 128], strides = [1, 1]} : vector<8x512xf32> to vector<8x128xf32>
    %cst_34 = arith.constant 5.000000e-01 : f32
    %72 = vector.broadcast %cst_34 : f32 to vector<8x128xf32>
    %73 = arith.mulf %72, %71 : vector<8x128xf32>
    %74 = math.tanh %73 : vector<8x128xf32>
    %cst_35 = arith.constant 5.000000e-01 : f32
    %75 = vector.broadcast %cst_35 : f32 to vector<8x128xf32>
    %76 = arith.mulf %75, %74 : vector<8x128xf32>
    %cst_36 = arith.constant 5.000000e-01 : f32
    %77 = vector.broadcast %cst_36 : f32 to vector<8x128xf32>
    %78 = arith.addf %76, %77 : vector<8x128xf32>
    %79 = arith.mulf %68, %44 : vector<8x128xf32>
    %80 = arith.mulf %60, %70 : vector<8x128xf32>
    %81 = arith.addf %79, %80 : vector<8x128xf32>
    %82 = math.tanh %81 : vector<8x128xf32>
    %83 = arith.mulf %78, %82 : vector<8x128xf32>
    %c2_i32 = arith.constant 2 : i32
    %c8_i32_37 = arith.constant 8 : i32
    %84 = arith.muli %c2_i32, %c8_i32_37 : i32
    %85 = arith.index_cast %84 : i32 to index
    %c0_38 = arith.constant 0 : index
    %86 = vector.load %arg8[%85, %c0_38] : memref<64x512xf32, #tpu.memory_space<vmem>>, vector<8x512xf32>
    %c0_39 = arith.constant 0 : index
    %c0_40 = arith.constant 0 : index
    %87 = vector.load %arg3[%c0_39, %c0_40] : memref<128x512xf32, #tpu.memory_space<vmem>>, vector<128x512xf32>
    %cst_41 = arith.constant dense<0.000000e+00> : vector<8x512xf32>
    %88 = tpu.matmul %83, %87, %cst_41 {dimension_numbers = #tpu.dot_dimension_numbers<[1], [0], [0], [1], [0, 0, 1, 1], [], []>} : vector<8x128xf32>, vector<128x512xf32>, vector<8x512xf32> -> vector<8x512xf32>
    %89 = arith.addf %86, %88 : vector<8x512xf32>
    %90 = vector.extract_strided_slice %89 {offsets = [0, 0], sizes = [8, 128], strides = [1, 1]} : vector<8x512xf32> to vector<8x128xf32>
    %cst_42 = arith.constant 5.000000e-01 : f32
    %91 = vector.broadcast %cst_42 : f32 to vector<8x128xf32>
    %92 = arith.mulf %91, %90 : vector<8x128xf32>
    %93 = math.tanh %92 : vector<8x128xf32>
    %cst_43 = arith.constant 5.000000e-01 : f32
    %94 = vector.broadcast %cst_43 : f32 to vector<8x128xf32>
    %95 = arith.mulf %94, %93 : vector<8x128xf32>
    %cst_44 = arith.constant 5.000000e-01 : f32
    %96 = vector.broadcast %cst_44 : f32 to vector<8x128xf32>
    %97 = arith.addf %95, %96 : vector<8x128xf32>
    %98 = vector.extract_strided_slice %89 {offsets = [0, 128], sizes = [8, 128], strides = [1, 1]} : vector<8x512xf32> to vector<8x128xf32>
    %cst_45 = arith.constant 5.000000e-01 : f32
    %99 = vector.broadcast %cst_45 : f32 to vector<8x128xf32>
    %100 = arith.mulf %99, %98 : vector<8x128xf32>
    %101 = math.tanh %100 : vector<8x128xf32>
    %cst_46 = arith.constant 5.000000e-01 : f32
    %102 = vector.broadcast %cst_46 : f32 to vector<8x128xf32>
    %103 = arith.mulf %102, %101 : vector<8x128xf32>
    %cst_47 = arith.constant 5.000000e-01 : f32
    %104 = vector.broadcast %cst_47 : f32 to vector<8x128xf32>
    %105 = arith.addf %103, %104 : vector<8x128xf32>
    %106 = vector.extract_strided_slice %89 {offsets = [0, 256], sizes = [8, 128], strides = [1, 1]} : vector<8x512xf32> to vector<8x128xf32>
    %107 = math.tanh %106 : vector<8x128xf32>
    %108 = vector.extract_strided_slice %89 {offsets = [0, 384], sizes = [8, 128], strides = [1, 1]} : vector<8x512xf32> to vector<8x128xf32>
    %cst_48 = arith.constant 5.000000e-01 : f32
    %109 = vector.broadcast %cst_48 : f32 to vector<8x128xf32>
    %110 = arith.mulf %109, %108 : vector<8x128xf32>
    %111 = math.tanh %110 : vector<8x128xf32>
    %cst_49 = arith.constant 5.000000e-01 : f32
    %112 = vector.broadcast %cst_49 : f32 to vector<8x128xf32>
    %113 = arith.mulf %112, %111 : vector<8x128xf32>
    %cst_50 = arith.constant 5.000000e-01 : f32
    %114 = vector.broadcast %cst_50 : f32 to vector<8x128xf32>
    %115 = arith.addf %113, %114 : vector<8x128xf32>
    %116 = arith.mulf %105, %81 : vector<8x128xf32>
    %117 = arith.mulf %97, %107 : vector<8x128xf32>
    %118 = arith.addf %116, %117 : vector<8x128xf32>
    %119 = math.tanh %118 : vector<8x128xf32>
    %120 = arith.mulf %115, %119 : vector<8x128xf32>
    %c3_i32 = arith.constant 3 : i32
    %c8_i32_51 = arith.constant 8 : i32
    %121 = arith.muli %c3_i32, %c8_i32_51 : i32
    %122 = arith.index_cast %121 : i32 to index
    %c0_52 = arith.constant 0 : index
    %123 = vector.load %arg8[%122, %c0_52] : memref<64x512xf32, #tpu.memory_space<vmem>>, vector<8x512xf32>
    %c0_53 = arith.constant 0 : index
    %c0_54 = arith.constant 0 : index
    %124 = vector.load %arg3[%c0_53, %c0_54] : memref<128x512xf32, #tpu.memory_space<vmem>>, vector<128x512xf32>
    %cst_55 = arith.constant dense<0.000000e+00> : vector<8x512xf32>
    %125 = tpu.matmul %120, %124, %cst_55 {dimension_numbers = #tpu.dot_dimension_numbers<[1], [0], [0], [1], [0, 0, 1, 1], [], []>} : vector<8x128xf32>, vector<128x512xf32>, vector<8x512xf32> -> vector<8x512xf32>
    %126 = arith.addf %123, %125 : vector<8x512xf32>
    %127 = vector.extract_strided_slice %126 {offsets = [0, 0], sizes = [8, 128], strides = [1, 1]} : vector<8x512xf32> to vector<8x128xf32>
    %cst_56 = arith.constant 5.000000e-01 : f32
    %128 = vector.broadcast %cst_56 : f32 to vector<8x128xf32>
    %129 = arith.mulf %128, %127 : vector<8x128xf32>
    %130 = math.tanh %129 : vector<8x128xf32>
    %cst_57 = arith.constant 5.000000e-01 : f32
    %131 = vector.broadcast %cst_57 : f32 to vector<8x128xf32>
    %132 = arith.mulf %131, %130 : vector<8x128xf32>
    %cst_58 = arith.constant 5.000000e-01 : f32
    %133 = vector.broadcast %cst_58 : f32 to vector<8x128xf32>
    %134 = arith.addf %132, %133 : vector<8x128xf32>
    %135 = vector.extract_strided_slice %126 {offsets = [0, 128], sizes = [8, 128], strides = [1, 1]} : vector<8x512xf32> to vector<8x128xf32>
    %cst_59 = arith.constant 5.000000e-01 : f32
    %136 = vector.broadcast %cst_59 : f32 to vector<8x128xf32>
    %137 = arith.mulf %136, %135 : vector<8x128xf32>
    %138 = math.tanh %137 : vector<8x128xf32>
    %cst_60 = arith.constant 5.000000e-01 : f32
    %139 = vector.broadcast %cst_60 : f32 to vector<8x128xf32>
    %140 = arith.mulf %139, %138 : vector<8x128xf32>
    %cst_61 = arith.constant 5.000000e-01 : f32
    %141 = vector.broadcast %cst_61 : f32 to vector<8x128xf32>
    %142 = arith.addf %140, %141 : vector<8x128xf32>
    %143 = vector.extract_strided_slice %126 {offsets = [0, 256], sizes = [8, 128], strides = [1, 1]} : vector<8x512xf32> to vector<8x128xf32>
    %144 = math.tanh %143 : vector<8x128xf32>
    %145 = vector.extract_strided_slice %126 {offsets = [0, 384], sizes = [8, 128], strides = [1, 1]} : vector<8x512xf32> to vector<8x128xf32>
    %cst_62 = arith.constant 5.000000e-01 : f32
    %146 = vector.broadcast %cst_62 : f32 to vector<8x128xf32>
    %147 = arith.mulf %146, %145 : vector<8x128xf32>
    %148 = math.tanh %147 : vector<8x128xf32>
    %cst_63 = arith.constant 5.000000e-01 : f32
    %149 = vector.broadcast %cst_63 : f32 to vector<8x128xf32>
    %150 = arith.mulf %149, %148 : vector<8x128xf32>
    %cst_64 = arith.constant 5.000000e-01 : f32
    %151 = vector.broadcast %cst_64 : f32 to vector<8x128xf32>
    %152 = arith.addf %150, %151 : vector<8x128xf32>
    %153 = arith.mulf %142, %118 : vector<8x128xf32>
    %154 = arith.mulf %134, %144 : vector<8x128xf32>
    %155 = arith.addf %153, %154 : vector<8x128xf32>
    %156 = math.tanh %155 : vector<8x128xf32>
    %157 = arith.mulf %152, %156 : vector<8x128xf32>
    %c4_i32 = arith.constant 4 : i32
    %c8_i32_65 = arith.constant 8 : i32
    %158 = arith.muli %c4_i32, %c8_i32_65 : i32
    %159 = arith.index_cast %158 : i32 to index
    %c0_66 = arith.constant 0 : index
    %160 = vector.load %arg8[%159, %c0_66] : memref<64x512xf32, #tpu.memory_space<vmem>>, vector<8x512xf32>
    %c0_67 = arith.constant 0 : index
    %c0_68 = arith.constant 0 : index
    %161 = vector.load %arg3[%c0_67, %c0_68] : memref<128x512xf32, #tpu.memory_space<vmem>>, vector<128x512xf32>
    %cst_69 = arith.constant dense<0.000000e+00> : vector<8x512xf32>
    %162 = tpu.matmul %157, %161, %cst_69 {dimension_numbers = #tpu.dot_dimension_numbers<[1], [0], [0], [1], [0, 0, 1, 1], [], []>} : vector<8x128xf32>, vector<128x512xf32>, vector<8x512xf32> -> vector<8x512xf32>
    %163 = arith.addf %160, %162 : vector<8x512xf32>
    %164 = vector.extract_strided_slice %163 {offsets = [0, 0], sizes = [8, 128], strides = [1, 1]} : vector<8x512xf32> to vector<8x128xf32>
    %cst_70 = arith.constant 5.000000e-01 : f32
    %165 = vector.broadcast %cst_70 : f32 to vector<8x128xf32>
    %166 = arith.mulf %165, %164 : vector<8x128xf32>
    %167 = math.tanh %166 : vector<8x128xf32>
    %cst_71 = arith.constant 5.000000e-01 : f32
    %168 = vector.broadcast %cst_71 : f32 to vector<8x128xf32>
    %169 = arith.mulf %168, %167 : vector<8x128xf32>
    %cst_72 = arith.constant 5.000000e-01 : f32
    %170 = vector.broadcast %cst_72 : f32 to vector<8x128xf32>
    %171 = arith.addf %169, %170 : vector<8x128xf32>
    %172 = vector.extract_strided_slice %163 {offsets = [0, 128], sizes = [8, 128], strides = [1, 1]} : vector<8x512xf32> to vector<8x128xf32>
    %cst_73 = arith.constant 5.000000e-01 : f32
    %173 = vector.broadcast %cst_73 : f32 to vector<8x128xf32>
    %174 = arith.mulf %173, %172 : vector<8x128xf32>
    %175 = math.tanh %174 : vector<8x128xf32>
    %cst_74 = arith.constant 5.000000e-01 : f32
    %176 = vector.broadcast %cst_74 : f32 to vector<8x128xf32>
    %177 = arith.mulf %176, %175 : vector<8x128xf32>
    %cst_75 = arith.constant 5.000000e-01 : f32
    %178 = vector.broadcast %cst_75 : f32 to vector<8x128xf32>
    %179 = arith.addf %177, %178 : vector<8x128xf32>
    %180 = vector.extract_strided_slice %163 {offsets = [0, 256], sizes = [8, 128], strides = [1, 1]} : vector<8x512xf32> to vector<8x128xf32>
    %181 = math.tanh %180 : vector<8x128xf32>
    %182 = vector.extract_strided_slice %163 {offsets = [0, 384], sizes = [8, 128], strides = [1, 1]} : vector<8x512xf32> to vector<8x128xf32>
    %cst_76 = arith.constant 5.000000e-01 : f32
    %183 = vector.broadcast %cst_76 : f32 to vector<8x128xf32>
    %184 = arith.mulf %183, %182 : vector<8x128xf32>
    %185 = math.tanh %184 : vector<8x128xf32>
    %cst_77 = arith.constant 5.000000e-01 : f32
    %186 = vector.broadcast %cst_77 : f32 to vector<8x128xf32>
    %187 = arith.mulf %186, %185 : vector<8x128xf32>
    %cst_78 = arith.constant 5.000000e-01 : f32
    %188 = vector.broadcast %cst_78 : f32 to vector<8x128xf32>
    %189 = arith.addf %187, %188 : vector<8x128xf32>
    %190 = arith.mulf %179, %155 : vector<8x128xf32>
    %191 = arith.mulf %171, %181 : vector<8x128xf32>
    %192 = arith.addf %190, %191 : vector<8x128xf32>
    %193 = math.tanh %192 : vector<8x128xf32>
    %194 = arith.mulf %189, %193 : vector<8x128xf32>
    %c5_i32 = arith.constant 5 : i32
    %c8_i32_79 = arith.constant 8 : i32
    %195 = arith.muli %c5_i32, %c8_i32_79 : i32
    %196 = arith.index_cast %195 : i32 to index
    %c0_80 = arith.constant 0 : index
    %197 = vector.load %arg8[%196, %c0_80] : memref<64x512xf32, #tpu.memory_space<vmem>>, vector<8x512xf32>
    %c0_81 = arith.constant 0 : index
    %c0_82 = arith.constant 0 : index
    %198 = vector.load %arg3[%c0_81, %c0_82] : memref<128x512xf32, #tpu.memory_space<vmem>>, vector<128x512xf32>
    %cst_83 = arith.constant dense<0.000000e+00> : vector<8x512xf32>
    %199 = tpu.matmul %194, %198, %cst_83 {dimension_numbers = #tpu.dot_dimension_numbers<[1], [0], [0], [1], [0, 0, 1, 1], [], []>} : vector<8x128xf32>, vector<128x512xf32>, vector<8x512xf32> -> vector<8x512xf32>
    %200 = arith.addf %197, %199 : vector<8x512xf32>
    %201 = vector.extract_strided_slice %200 {offsets = [0, 0], sizes = [8, 128], strides = [1, 1]} : vector<8x512xf32> to vector<8x128xf32>
    %cst_84 = arith.constant 5.000000e-01 : f32
    %202 = vector.broadcast %cst_84 : f32 to vector<8x128xf32>
    %203 = arith.mulf %202, %201 : vector<8x128xf32>
    %204 = math.tanh %203 : vector<8x128xf32>
    %cst_85 = arith.constant 5.000000e-01 : f32
    %205 = vector.broadcast %cst_85 : f32 to vector<8x128xf32>
    %206 = arith.mulf %205, %204 : vector<8x128xf32>
    %cst_86 = arith.constant 5.000000e-01 : f32
    %207 = vector.broadcast %cst_86 : f32 to vector<8x128xf32>
    %208 = arith.addf %206, %207 : vector<8x128xf32>
    %209 = vector.extract_strided_slice %200 {offsets = [0, 128], sizes = [8, 128], strides = [1, 1]} : vector<8x512xf32> to vector<8x128xf32>
    %cst_87 = arith.constant 5.000000e-01 : f32
    %210 = vector.broadcast %cst_87 : f32 to vector<8x128xf32>
    %211 = arith.mulf %210, %209 : vector<8x128xf32>
    %212 = math.tanh %211 : vector<8x128xf32>
    %cst_88 = arith.constant 5.000000e-01 : f32
    %213 = vector.broadcast %cst_88 : f32 to vector<8x128xf32>
    %214 = arith.mulf %213, %212 : vector<8x128xf32>
    %cst_89 = arith.constant 5.000000e-01 : f32
    %215 = vector.broadcast %cst_89 : f32 to vector<8x128xf32>
    %216 = arith.addf %214, %215 : vector<8x128xf32>
    %217 = vector.extract_strided_slice %200 {offsets = [0, 256], sizes = [8, 128], strides = [1, 1]} : vector<8x512xf32> to vector<8x128xf32>
    %218 = math.tanh %217 : vector<8x128xf32>
    %219 = vector.extract_strided_slice %200 {offsets = [0, 384], sizes = [8, 128], strides = [1, 1]} : vector<8x512xf32> to vector<8x128xf32>
    %cst_90 = arith.constant 5.000000e-01 : f32
    %220 = vector.broadcast %cst_90 : f32 to vector<8x128xf32>
    %221 = arith.mulf %220, %219 : vector<8x128xf32>
    %222 = math.tanh %221 : vector<8x128xf32>
    %cst_91 = arith.constant 5.000000e-01 : f32
    %223 = vector.broadcast %cst_91 : f32 to vector<8x128xf32>
    %224 = arith.mulf %223, %222 : vector<8x128xf32>
    %cst_92 = arith.constant 5.000000e-01 : f32
    %225 = vector.broadcast %cst_92 : f32 to vector<8x128xf32>
    %226 = arith.addf %224, %225 : vector<8x128xf32>
    %227 = arith.mulf %216, %192 : vector<8x128xf32>
    %228 = arith.mulf %208, %218 : vector<8x128xf32>
    %229 = arith.addf %227, %228 : vector<8x128xf32>
    %230 = math.tanh %229 : vector<8x128xf32>
    %231 = arith.mulf %226, %230 : vector<8x128xf32>
    %c6_i32 = arith.constant 6 : i32
    %c8_i32_93 = arith.constant 8 : i32
    %232 = arith.muli %c6_i32, %c8_i32_93 : i32
    %233 = arith.index_cast %232 : i32 to index
    %c0_94 = arith.constant 0 : index
    %234 = vector.load %arg8[%233, %c0_94] : memref<64x512xf32, #tpu.memory_space<vmem>>, vector<8x512xf32>
    %c0_95 = arith.constant 0 : index
    %c0_96 = arith.constant 0 : index
    %235 = vector.load %arg3[%c0_95, %c0_96] : memref<128x512xf32, #tpu.memory_space<vmem>>, vector<128x512xf32>
    %cst_97 = arith.constant dense<0.000000e+00> : vector<8x512xf32>
    %236 = tpu.matmul %231, %235, %cst_97 {dimension_numbers = #tpu.dot_dimension_numbers<[1], [0], [0], [1], [0, 0, 1, 1], [], []>} : vector<8x128xf32>, vector<128x512xf32>, vector<8x512xf32> -> vector<8x512xf32>
    %237 = arith.addf %234, %236 : vector<8x512xf32>
    %238 = vector.extract_strided_slice %237 {offsets = [0, 0], sizes = [8, 128], strides = [1, 1]} : vector<8x512xf32> to vector<8x128xf32>
    %cst_98 = arith.constant 5.000000e-01 : f32
    %239 = vector.broadcast %cst_98 : f32 to vector<8x128xf32>
    %240 = arith.mulf %239, %238 : vector<8x128xf32>
    %241 = math.tanh %240 : vector<8x128xf32>
    %cst_99 = arith.constant 5.000000e-01 : f32
    %242 = vector.broadcast %cst_99 : f32 to vector<8x128xf32>
    %243 = arith.mulf %242, %241 : vector<8x128xf32>
    %cst_100 = arith.constant 5.000000e-01 : f32
    %244 = vector.broadcast %cst_100 : f32 to vector<8x128xf32>
    %245 = arith.addf %243, %244 : vector<8x128xf32>
    %246 = vector.extract_strided_slice %237 {offsets = [0, 128], sizes = [8, 128], strides = [1, 1]} : vector<8x512xf32> to vector<8x128xf32>
    %cst_101 = arith.constant 5.000000e-01 : f32
    %247 = vector.broadcast %cst_101 : f32 to vector<8x128xf32>
    %248 = arith.mulf %247, %246 : vector<8x128xf32>
    %249 = math.tanh %248 : vector<8x128xf32>
    %cst_102 = arith.constant 5.000000e-01 : f32
    %250 = vector.broadcast %cst_102 : f32 to vector<8x128xf32>
    %251 = arith.mulf %250, %249 : vector<8x128xf32>
    %cst_103 = arith.constant 5.000000e-01 : f32
    %252 = vector.broadcast %cst_103 : f32 to vector<8x128xf32>
    %253 = arith.addf %251, %252 : vector<8x128xf32>
    %254 = vector.extract_strided_slice %237 {offsets = [0, 256], sizes = [8, 128], strides = [1, 1]} : vector<8x512xf32> to vector<8x128xf32>
    %255 = math.tanh %254 : vector<8x128xf32>
    %256 = vector.extract_strided_slice %237 {offsets = [0, 384], sizes = [8, 128], strides = [1, 1]} : vector<8x512xf32> to vector<8x128xf32>
    %cst_104 = arith.constant 5.000000e-01 : f32
    %257 = vector.broadcast %cst_104 : f32 to vector<8x128xf32>
    %258 = arith.mulf %257, %256 : vector<8x128xf32>
    %259 = math.tanh %258 : vector<8x128xf32>
    %cst_105 = arith.constant 5.000000e-01 : f32
    %260 = vector.broadcast %cst_105 : f32 to vector<8x128xf32>
    %261 = arith.mulf %260, %259 : vector<8x128xf32>
    %cst_106 = arith.constant 5.000000e-01 : f32
    %262 = vector.broadcast %cst_106 : f32 to vector<8x128xf32>
    %263 = arith.addf %261, %262 : vector<8x128xf32>
    %264 = arith.mulf %253, %229 : vector<8x128xf32>
    %265 = arith.mulf %245, %255 : vector<8x128xf32>
    %266 = arith.addf %264, %265 : vector<8x128xf32>
    %267 = math.tanh %266 : vector<8x128xf32>
    %268 = arith.mulf %263, %267 : vector<8x128xf32>
    %c7_i32 = arith.constant 7 : i32
    %c8_i32_107 = arith.constant 8 : i32
    %269 = arith.muli %c7_i32, %c8_i32_107 : i32
    %270 = arith.index_cast %269 : i32 to index
    %c0_108 = arith.constant 0 : index
    %271 = vector.load %arg8[%270, %c0_108] : memref<64x512xf32, #tpu.memory_space<vmem>>, vector<8x512xf32>
    %c0_109 = arith.constant 0 : index
    %c0_110 = arith.constant 0 : index
    %272 = vector.load %arg3[%c0_109, %c0_110] : memref<128x512xf32, #tpu.memory_space<vmem>>, vector<128x512xf32>
    %cst_111 = arith.constant dense<0.000000e+00> : vector<8x512xf32>
    %273 = tpu.matmul %268, %272, %cst_111 {dimension_numbers = #tpu.dot_dimension_numbers<[1], [0], [0], [1], [0, 0, 1, 1], [], []>} : vector<8x128xf32>, vector<128x512xf32>, vector<8x512xf32> -> vector<8x512xf32>
    %274 = arith.addf %271, %273 : vector<8x512xf32>
    %275 = vector.extract_strided_slice %274 {offsets = [0, 0], sizes = [8, 128], strides = [1, 1]} : vector<8x512xf32> to vector<8x128xf32>
    %cst_112 = arith.constant 5.000000e-01 : f32
    %276 = vector.broadcast %cst_112 : f32 to vector<8x128xf32>
    %277 = arith.mulf %276, %275 : vector<8x128xf32>
    %278 = math.tanh %277 : vector<8x128xf32>
    %cst_113 = arith.constant 5.000000e-01 : f32
    %279 = vector.broadcast %cst_113 : f32 to vector<8x128xf32>
    %280 = arith.mulf %279, %278 : vector<8x128xf32>
    %cst_114 = arith.constant 5.000000e-01 : f32
    %281 = vector.broadcast %cst_114 : f32 to vector<8x128xf32>
    %282 = arith.addf %280, %281 : vector<8x128xf32>
    %283 = vector.extract_strided_slice %274 {offsets = [0, 128], sizes = [8, 128], strides = [1, 1]} : vector<8x512xf32> to vector<8x128xf32>
    %cst_115 = arith.constant 5.000000e-01 : f32
    %284 = vector.broadcast %cst_115 : f32 to vector<8x128xf32>
    %285 = arith.mulf %284, %283 : vector<8x128xf32>
    %286 = math.tanh %285 : vector<8x128xf32>
    %cst_116 = arith.constant 5.000000e-01 : f32
    %287 = vector.broadcast %cst_116 : f32 to vector<8x128xf32>
    %288 = arith.mulf %287, %286 : vector<8x128xf32>
    %cst_117 = arith.constant 5.000000e-01 : f32
    %289 = vector.broadcast %cst_117 : f32 to vector<8x128xf32>
    %290 = arith.addf %288, %289 : vector<8x128xf32>
    %291 = vector.extract_strided_slice %274 {offsets = [0, 256], sizes = [8, 128], strides = [1, 1]} : vector<8x512xf32> to vector<8x128xf32>
    %292 = math.tanh %291 : vector<8x128xf32>
    %293 = vector.extract_strided_slice %274 {offsets = [0, 384], sizes = [8, 128], strides = [1, 1]} : vector<8x512xf32> to vector<8x128xf32>
    %cst_118 = arith.constant 5.000000e-01 : f32
    %294 = vector.broadcast %cst_118 : f32 to vector<8x128xf32>
    %295 = arith.mulf %294, %293 : vector<8x128xf32>
    %296 = math.tanh %295 : vector<8x128xf32>
    %cst_119 = arith.constant 5.000000e-01 : f32
    %297 = vector.broadcast %cst_119 : f32 to vector<8x128xf32>
    %298 = arith.mulf %297, %296 : vector<8x128xf32>
    %cst_120 = arith.constant 5.000000e-01 : f32
    %299 = vector.broadcast %cst_120 : f32 to vector<8x128xf32>
    %300 = arith.addf %298, %299 : vector<8x128xf32>
    %301 = arith.mulf %290, %266 : vector<8x128xf32>
    %302 = arith.mulf %282, %292 : vector<8x128xf32>
    %303 = arith.addf %301, %302 : vector<8x128xf32>
    %304 = math.tanh %303 : vector<8x128xf32>
    %305 = arith.mulf %300, %304 : vector<8x128xf32>
    %c8_i32_121 = arith.constant 8 : i32
    %c0_122 = arith.constant 0 : index
    %c0_123 = arith.constant 0 : index
    %306 = vector.load %arg5[%c0_122, %c0_123] : memref<128x128xf32, #tpu.memory_space<vmem>>, vector<128x128xf32>
    %cst_124 = arith.constant dense<0.000000e+00> : vector<8x128xf32>
    %307 = tpu.matmul %305, %306, %cst_124 {dimension_numbers = #tpu.dot_dimension_numbers<[1], [0], [0], [1], [0, 0, 1, 1], [], []>} : vector<8x128xf32>, vector<128x128xf32>, vector<8x128xf32> -> vector<8x128xf32>
    %c0_125 = arith.constant 0 : index
    %c0_126 = arith.constant 0 : index
    %308 = vector.load %arg6[%c0_125, %c0_126] : memref<1x128xf32, #tpu.memory_space<vmem>>, vector<1x128xf32>
    %309 = vector.broadcast %308 : vector<1x128xf32> to vector<8x128xf32>
    %310 = arith.addf %307, %309 : vector<8x128xf32>
    %c0_127 = arith.constant 0 : index
    %c0_128 = arith.constant 0 : index
    %311 = vector.load %arg7[%c0_127, %c0_128] : memref<8x128xf32, #tpu.memory_space<vmem>>, vector<8x128xf32>
    tpu.vector_store %arg7[%c0_127, %c0_128], %310 {strides = array<i32>} : memref<8x128xf32, #tpu.memory_space<vmem>>, vector<8x128xf32>,
    return
  }
  func.func @transform_0(%arg0: i32) -> (i32, i32, i32) {
    %c0_i32 = arith.constant 0 : i32
    %c0_i32_0 = arith.constant 0 : i32
    %c0_i32_1 = arith.constant 0 : i32
    return %c0_i32, %arg0, %c0_i32_0 : i32, i32, i32
  }
  func.func @transform_1(%arg0: i32) -> (i32, i32) {
    %c0_i32 = arith.constant 0 : i32
    %c0_i32_0 = arith.constant 0 : i32
    %c0_i32_1 = arith.constant 0 : i32
    return %c0_i32, %c0_i32_0 : i32, i32
  }
  func.func @transform_2(%arg0: i32) -> (i32, i32) {
    %c0_i32 = arith.constant 0 : i32
    %c0_i32_0 = arith.constant 0 : i32
    %c0_i32_1 = arith.constant 0 : i32
    return %c0_i32, %c0_i32_0 : i32, i32
  }
  func.func @transform_3(%arg0: i32) -> (i32, i32) {
    %c0_i32 = arith.constant 0 : i32
    %c0_i32_0 = arith.constant 0 : i32
    %c0_i32_1 = arith.constant 0 : i32
    return %c0_i32, %c0_i32_0 : i32, i32
  }
  func.func @transform_4(%arg0: i32) -> (i32, i32) {
    %c0_i32 = arith.constant 0 : i32
    %c0_i32_0 = arith.constant 0 : i32
    %c0_i32_1 = arith.constant 0 : i32
    return %c0_i32, %c0_i32_0 : i32, i32
  }
  func.func @transform_5(%arg0: i32) -> (i32, i32) {
    %c0_i32 = arith.constant 0 : i32
    %c0_i32_0 = arith.constant 0 : i32
    %c0_i32_1 = arith.constant 0 : i32
    return %c0_i32, %c0_i32_0 : i32, i32
  }
  func.func @transform_6(%arg0: i32) -> (i32, i32) {
    %c0_i32 = arith.constant 0 : i32
    %c0_i32_0 = arith.constant 0 : i32
    return %arg0, %c0_i32 : i32, i32
  }
}

</mosaic_0001>

<llo_original>
// kernel: tpu_custom_call.1
$region0: #{tpu_custom_call.1}
  #allocation0 [shape = 'u32[]', space=smem, size = 0x4, offset = 0x4, fixed_abs, tag = 'smem constant byte address 0x4 - core index']
  #allocation1 [shape = 'u32[144,128]{1,0:T(1,128)}', space=vmem, size = 0x12000, scoped, tag = 'internal scratch']
  #allocation2 [shape = 'f32[64,512]{1,0:T(8,128)}', space=vmem, size = 0x20000, scoped, tag = 'scratch operand']
  %s0 = inlined_call_operand.hbm [shape: f32[8,8,128], index: 0, kind: input, shape index: {}]
  %s1 = inlined_call_operand.hbm [shape: f32[128,512], index: 1, kind: input, shape index: {}]
  %s2 = inlined_call_operand.hbm [shape: f32[128,512], index: 2, kind: input, shape index: {}]
  %s3 = inlined_call_operand.vmem [shape: f32[1,512], index: 3, kind: input, shape index: {}]
  %s4 = inlined_call_operand.hbm [shape: f32[128,128], index: 4, kind: input, shape index: {}]
  %s5 = inlined_call_operand.vmem [shape: f32[1,128], index: 5, kind: input, shape index: {}]
  %s6 = inlined_call_operand.hbm [shape: f32[8,128], index: 6, kind: output, shape index: {}]
  %s7 = sld [smem:[#allocation0]]
  $region50: #{tpu_custom_call.1} parent=0
    _
  %s9 = ssub.s32 1, %s7
  %s10 = scalar_select 0, %s9, %s7
  $region1: #{tpu_custom_call.1} parent=0
    #allocation3 [shape = 'u8[32768]{0}', space=vmem, size = 0x8000, scoped, tag = 'input window, operand 0, single buffered']
    #allocation4 [shape = 's32[1]{0}', space=sflag, size = 0x4, scoped, tag = 'scoped memory for tpu_custom_call.1']
    #allocation5 [shape = 's32[1]{0}', space=sflag, size = 0x4, scoped, tag = 'scoped memory for tpu_custom_call.1']
    #allocation6 [shape = 'u8[262144]{0}', space=vmem, size = 0x40000, scoped, tag = 'input window, operand 1, single buffered']
    #allocation7 [shape = 's32[1]{0}', space=sflag, size = 0x4, scoped, tag = 'scoped memory for tpu_custom_call.1']
    #allocation8 [shape = 'u8[262144]{0}', space=vmem, size = 0x40000, scoped, tag = 'input window, operand 2, single buffered']
    #allocation9 [shape = 'u8[65536]{0}', space=vmem, size = 0x10000, scoped, tag = 'input window, operand 4, single buffered']
    #allocation10 [shape = 's32[1]{0}', space=sflag, size = 0x4, scoped, tag = 'scoped memory for tpu_custom_call.1']
    #allocation11 [shape = 'u8[4096]{0}', space=vmem, size = 0x1000, scoped, tag = 'output window, operand 0, single buffered']
    %11 = vsyncpa [#allocation4], 0
    %12 = vsyncpa [#allocation7], 0
    %13 = vsyncpa [#allocation10], 0
    %14 = vsyncpa [#allocation5], 0
    // Predicated region
    $region2: #{tpu_custom_call.1} parent=1 // pred_check
      _
    $region3: #{tpu_custom_call.1} parent=1 // pred_check_branch
      %16 = sbr.rel (0) target = $region5
    $region4: #{tpu_custom_call.1} parent=1 // pred_region
      %s18 = ssub.s32 1024, 1024
      %19 = vsyncadd [#allocation4], %s18
      %s20 = sshll.u32 [#allocation3], 4
      %s21 = int_to_ptr.vmem [resolvable:$true] %s20
      %26 = dma.hbm_to_vmem [thread:$0]  %s0, 1024, %s21, [#allocation4], 128, 128, 8
    $region5: #{tpu_custom_call.1} parent=1 // pred_fallthru
      _
    // Predicated region
    $region6: #{tpu_custom_call.1} parent=1 // pred_check
      _
    $region7: #{tpu_custom_call.1} parent=1 // pred_check_branch
      %28 = sbr.rel (0) target = $region9
    $region8: #{tpu_custom_call.1} parent=1 // pred_region
      %s30 = ssub.s32 8192, 8192
      %31 = vsyncadd [#allocation7], %s30
      %s32 = sshll.u32 [#allocation6], 4
      %s33 = int_to_ptr.vmem [resolvable:$true] %s32
      %38 = dma.hbm_to_vmem [thread:$0]  %s1, 8192, %s33, [#allocation7], 512, 512, 32
    $region9: #{tpu_custom_call.1} parent=1 // pred_fallthru
      _
    // Predicated region
    $region10: #{tpu_custom_call.1} parent=1 // pred_check
      _
    $region11: #{tpu_custom_call.1} parent=1 // pred_check_branch
      %40 = sbr.rel (0) target = $region13
    $region12: #{tpu_custom_call.1} parent=1 // pred_region
      %s42 = ssub.s32 8192, 8192
      %43 = vsyncadd [#allocation7], %s42
      %s44 = sshll.u32 [#allocation8], 4
      %s45 = int_to_ptr.vmem [resolvable:$true] %s44
      %50 = dma.hbm_to_vmem [thread:$0]  %s2, 8192, %s45, [#allocation7], 512, 512, 32
    $region13: #{tpu_custom_call.1} parent=1 // pred_fallthru
      _
    // Predicated region
    $region14: #{tpu_custom_call.1} parent=1 // pred_check
      _
    $region15: #{tpu_custom_call.1} parent=1 // pred_check_branch
      %52 = sbr.rel (0) target = $region17
    $region16: #{tpu_custom_call.1} parent=1 // pred_region
      _
    $region17: #{tpu_custom_call.1} parent=1 // pred_fallthru
      _
    // Predicated region
    $region18: #{tpu_custom_call.1} parent=1 // pred_check
      _
    $region19: #{tpu_custom_call.1} parent=1 // pred_check_branch
      %54 = sbr.rel (0) target = $region21
    $region20: #{tpu_custom_call.1} parent=1 // pred_region
      %s56 = ssub.s32 2048, 2048
      %57 = vsyncadd [#allocation10], %s56
      %s58 = sshll.u32 [#allocation9], 4
      %s59 = int_to_ptr.vmem [resolvable:$true] %s58
      %64 = dma.hbm_to_vmem [thread:$0]  %s4, 2048, %s59, [#allocation10], 128, 128, 8
    $region21: #{tpu_custom_call.1} parent=1 // pred_fallthru
      _
    // Predicated region
    $region22: #{tpu_custom_call.1} parent=1 // pred_check
      _
    $region23: #{tpu_custom_call.1} parent=1 // pred_check_branch
      %66 = sbr.rel (0) target = $region25
    $region24: #{tpu_custom_call.1} parent=1 // pred_region
      _
    $region25: #{tpu_custom_call.1} parent=1 // pred_fallthru
      _
    // Predicated region
    $region26: #{tpu_custom_call.1} parent=1 // pred_check
      _
    $region27: #{tpu_custom_call.1} parent=1 // pred_check_branch
      %68 = sbr.rel (0) target = $region29
    $region28: #{tpu_custom_call.1} parent=1 // pred_region
      %69 = dma.done [#allocation4], 1024
    $region29: #{tpu_custom_call.1} parent=1 // pred_fallthru
      _
    // Predicated region
    $region30: #{tpu_custom_call.1} parent=1 // pred_check
      _
    $region31: #{tpu_custom_call.1} parent=1 // pred_check_branch
      %71 = sbr.rel (0) target = $region33
    $region32: #{tpu_custom_call.1} parent=1 // pred_region
      %72 = dma.done [#allocation7], 8192
    $region33: #{tpu_custom_call.1} parent=1 // pred_fallthru
      _
    // Predicated region
    $region34: #{tpu_custom_call.1} parent=1 // pred_check
      _
    $region35: #{tpu_custom_call.1} parent=1 // pred_check_branch
      %74 = sbr.rel (0) target = $region37
    $region36: #{tpu_custom_call.1} parent=1 // pred_region
      %75 = dma.done [#allocation7], 8192
    $region37: #{tpu_custom_call.1} parent=1 // pred_fallthru
      _
    // Predicated region
    $region38: #{tpu_custom_call.1} parent=1 // pred_check
      _
    $region39: #{tpu_custom_call.1} parent=1 // pred_check_branch
      %77 = sbr.rel (0) target = $region41
    $region40: #{tpu_custom_call.1} parent=1 // pred_region
      %78 = dma.done [#allocation10], 2048
    $region41: #{tpu_custom_call.1} parent=1 // pred_fallthru
      _
    %v79 = vld [vmem:[#allocation3] sm:$0xff]
    %v80 = vld [vmem:[#allocation3 + $0x8] sm:$0xff]
    %v81 = vld [vmem:[#allocation3 + $0x10] sm:$0xff]
    %v82 = vld [vmem:[#allocation3 + $0x18] sm:$0xff]
    %v83 = vld [vmem:[#allocation3 + $0x20] sm:$0xff]
    %v84 = vld [vmem:[#allocation3 + $0x28] sm:$0xff]
    %v85 = vld [vmem:[#allocation3 + $0x30] sm:$0xff]
    %v86 = vld [vmem:[#allocation3 + $0x38] sm:$0xff]
    %v87 = vld [vmem:[#allocation6] sm:$0xff]
    %v88 = vld [vmem:[#allocation6 + $0x8] sm:$0xff]
    %v89 = vld [vmem:[#allocation6 + $0x10] sm:$0xff]
    %v90 = vld [vmem:[#allocation6 + $0x18] sm:$0xff]
    %v91 = vld [vmem:[#allocation6 + $0x20] sm:$0xff]
    %v92 = vld [vmem:[#allocation6 + $0x28] sm:$0xff]
    %v93 = vld [vmem:[#allocation6 + $0x30] sm:$0xff]
    %v94 = vld [vmem:[#allocation6 + $0x38] sm:$0xff]
    %v95 = vld [vmem:[#allocation6 + $0x40] sm:$0xff]
    %v96 = vld [vmem:[#allocation6 + $0x48] sm:$0xff]
    %v97 = vld [vmem:[#allocation6 + $0x50] sm:$0xff]
    %v98 = vld [vmem:[#allocation6 + $0x58] sm:$0xff]
    %v99 = vld [vmem:[#allocation6 + $0x60] sm:$0xff]
    %v100 = vld [vmem:[#allocation6 + $0x68] sm:$0xff]
    %v101 = vld [vmem:[#allocation6 + $0x70] sm:$0xff]
    %v102 = vld [vmem:[#allocation6 + $0x78] sm:$0xff]
    %v103 = vld [vmem:[#allocation6 + $0x80] sm:$0xff]
    %v104 = vld [vmem:[#allocation6 + $0x88] sm:$0xff]
    %v105 = vld [vmem:[#allocation6 + $0x90] sm:$0xff]
    %v106 = vld [vmem:[#allocation6 + $0x98] sm:$0xff]
    %v107 = vld [vmem:[#allocation6 + $0xa0] sm:$0xff]
    %v108 = vld [vmem:[#allocation6 + $0xa8] sm:$0xff]
    %v109 = vld [vmem:[#allocation6 + $0xb0] sm:$0xff]
    %v110 = vld [vmem:[#allocation6 + $0xb8] sm:$0xff]
    %v111 = vld [vmem:[#allocation6 + $0xc0] sm:$0xff]
    %v112 = vld [vmem:[#allocation6 + $0xc8] sm:$0xff]
    %v113 = vld [vmem:[#allocation6 + $0xd0] sm:$0xff]
    %v114 = vld [vmem:[#allocation6 + $0xd8] sm:$0xff]
    %v115 = vld [vmem:[#allocation6 + $0xe0] sm:$0xff]
    %v116 = vld [vmem:[#allocation6 + $0xe8] sm:$0xff]
    %v117 = vld [vmem:[#allocation6 + $0xf0] sm:$0xff]
    %v118 = vld [vmem:[#allocation6 + $0xf8] sm:$0xff]
    %v119 = vld [vmem:[#allocation6 + $0x100] sm:$0xff]
    %v120 = vld [vmem:[#allocation6 + $0x108] sm:$0xff]
    %v121 = vld [vmem:[#allocation6 + $0x110] sm:$0xff]
    %v122 = vld [vmem:[#allocation6 + $0x118] sm:$0xff]
    %v123 = vld [vmem:[#allocation6 + $0x120] sm:$0xff]
    %v124 = vld [vmem:[#allocation6 + $0x128] sm:$0xff]
    %v125 = vld [vmem:[#allocation6 + $0x130] sm:$0xff]
    %v126 = vld [vmem:[#allocation6 + $0x138] sm:$0xff]
    %v127 = vld [vmem:[#allocation6 + $0x140] sm:$0xff]
    %v128 = vld [vmem:[#allocation6 + $0x148] sm:$0xff]
    %v129 = vld [vmem:[#allocation6 + $0x150] sm:$0xff]
    %v130 = vld [vmem:[#allocation6 + $0x158] sm:$0xff]
    %v131 = vld [vmem:[#allocation6 + $0x160] sm:$0xff]
    %v132 = vld [vmem:[#allocation6 + $0x168] sm:$0xff]
    %v133 = vld [vmem:[#allocation6 + $0x170] sm:$0xff]
    %v134 = vld [vmem:[#allocation6 + $0x178] sm:$0xff]
    %v135 = vld [vmem:[#allocation6 + $0x180] sm:$0xff]
    %v136 = vld [vmem:[#allocation6 + $0x188] sm:$0xff]
    %v137 = vld [vmem:[#allocation6 + $0x190] sm:$0xff]
    %v138 = vld [vmem:[#allocation6 + $0x198] sm:$0xff]
    %v139 = vld [vmem:[#allocation6 + $0x1a0] sm:$0xff]
    %v140 = vld [vmem:[#allocation6 + $0x1a8] sm:$0xff]
    %v141 = vld [vmem:[#allocation6 + $0x1b0] sm:$0xff]
    %v142 = vld [vmem:[#allocation6 + $0x1b8] sm:$0xff]
    %v143 = vld [vmem:[#allocation6 + $0x1c0] sm:$0xff]
    %v144 = vld [vmem:[#allocation6 + $0x1c8] sm:$0xff]
    %v145 = vld [vmem:[#allocation6 + $0x1d0] sm:$0xff]
    %v146 = vld [vmem:[#allocation6 + $0x1d8] sm:$0xff]
    %v147 = vld [vmem:[#allocation6 + $0x1e0] sm:$0xff]
    %v148 = vld [vmem:[#allocation6 + $0x1e8] sm:$0xff]
    %v149 = vld [vmem:[#allocation6 + $0x1f0] sm:$0xff]
    %v150 = vld [vmem:[#allocation6 + $0x1f8] sm:$0xff]
    %v151 = vld [vmem:[%s3] sm:$0xf]
    %v153 = vlaneseq
    %v154 = vshrl.u32 %v153, 7
    %v155 = vsub.s32 0, %v154
    %v156 = vrot.slane %v151, %v155
    %v157 = vlaneseq
    %v158 = vshrl.u32 %v157, 7
    %v159 = vsub.s32 1, %v158
    %v160 = vrot.slane %v151, %v159
    %v161 = vlaneseq
    %v162 = vshrl.u32 %v161, 7
    %v163 = vsub.s32 2, %v162
    %v164 = vrot.slane %v151, %v163
    %v165 = vlaneseq
    %v166 = vshrl.u32 %v165, 7
    %v167 = vsub.s32 3, %v166
    %v168 = vrot.slane %v151, %v167
    %173 = vmatprep.subr.mxu0 %v88
    %174 = vmatpush1.msra.mxu0 %v87
    %175 = vmatprep.subr.mxu0 %v92
    %176 = vmatpush1.msra.mxu0 %v91
    %177 = vmatprep.subr.mxu0 %v96
    %178 = vmatpush1.msra.mxu0 %v95
    %179 = vmatprep.subr.mxu0 %v100
    %180 = vmatpush1.msra.mxu0 %v99
    %181 = vmatprep.subr.mxu0 %v104
    %182 = vmatpush1.msra.mxu0 %v103
    %183 = vmatprep.subr.mxu0 %v108
    %184 = vmatpush1.msra.mxu0 %v107
    %185 = vmatprep.subr.mxu0 %v112
    %186 = vmatpush1.msra.mxu0 %v111
    %187 = vmatprep.subr.mxu0 %v116
    %188 = vmatpush1.msra.mxu0 %v115
    %189 = vmatprep.subr.mxu0 %v120
    %190 = vmatpush1.msra.mxu0 %v119
    %191 = vmatprep.subr.mxu0 %v124
    %192 = vmatpush1.msra.mxu0 %v123
    %193 = vmatprep.subr.mxu0 %v128
    %194 = vmatpush1.msra.mxu0 %v127
    %195 = vmatprep.subr.mxu0 %v132
    %196 = vmatpush1.msra.mxu0 %v131
    %197 = vmatprep.subr.mxu0 %v136
    %198 = vmatpush1.msra.mxu0 %v135
    %199 = vmatprep.subr.mxu0 %v140
    %200 = vmatpush1.msra.mxu0 %v139
    %201 = vmatprep.subr.mxu0 %v144
    %202 = vmatpush1.msra.mxu0 %v143
    %203 = vmatprep.subr.mxu0 %v148
    %204 = vmatpush1.msra.mxu0 %v147
    %205 = vmatprep.subr.mxu0 0.0
    %206 = vmatpush1.msra.mxu0 0.0
    %207 = vmatprep.subr.mxu0 0.0
    %208 = vmatpush1.msra.mxu0 0.0
    %209 = vmatprep.subr.mxu0 0.0
    %210 = vmatpush1.msra.mxu0 0.0
    %211 = vmatprep.subr.mxu0 0.0
    %212 = vmatpush1.msra.mxu0 0.0
    %213 = vmatprep.subr.mxu0 0.0
    %214 = vmatpush1.msra.mxu0 0.0
    %215 = vmatprep.subr.mxu0 0.0
    %216 = vmatpush1.msra.mxu0 0.0
    %217 = vmatprep.subr.mxu0 0.0
    %218 = vmatpush1.msra.mxu0 0.0
    %219 = vmatprep.subr.mxu0 0.0
    %220 = vmatpush1.msra.mxu0 0.0
    %221 = vmatprep.subr.mxu0 0.0
    %222 = vmatpush1.msra.mxu0 0.0
    %223 = vmatprep.subr.mxu0 0.0
    %224 = vmatpush1.msra.mxu0 0.0
    %225 = vmatprep.subr.mxu0 0.0
    %226 = vmatpush1.msra.mxu0 0.0
    %227 = vmatprep.subr.mxu0 0.0
    %228 = vmatpush1.msra.mxu0 0.0
    %229 = vmatprep.subr.mxu0 0.0
    %230 = vmatpush1.msra.mxu0 0.0
    %231 = vmatprep.subr.mxu0 0.0
    %232 = vmatpush1.msra.mxu0 0.0
    %233 = vmatprep.subr.mxu0 0.0
    %234 = vmatpush1.msra.mxu0 0.0
    %235 = vmatprep.subr.mxu0 0.0
    %236 = vmatpush1.msra.mxu0 0.0
    %237 = vmatprep.mubr.f32.mxu0 0.0
    %238 = vmatmul.mubr.f32.gmra.mrb[0].mxu0 %v79
    %v239 = vpop.f32.mrb[0].mxu0
    %v240 = vadd.f32 %v156, %v239
    %v241 = vpop.f32.mrb[0].mxu0
    %v242 = vadd.f32 %v160, %v241
    %243 = vmatprep.mubr.f32.mxu0 0.0
    %244 = vmatmul.mubr.f32.gmra.mrb[0].mxu0 %v80
    %v245 = vpop.f32.mrb[0].mxu0
    %v246 = vadd.f32 %v156, %v245
    %v247 = vpop.f32.mrb[0].mxu0
    %v248 = vadd.f32 %v160, %v247
    %249 = vmatprep.mubr.f32.mxu0 0.0
    %250 = vmatmul.mubr.f32.gmra.mrb[0].mxu0 %v81
    %v251 = vpop.f32.mrb[0].mxu0
    %v252 = vadd.f32 %v156, %v251
    %v253 = vpop.f32.mrb[0].mxu0
    %v254 = vadd.f32 %v160, %v253
    %255 = vmatprep.mubr.f32.mxu0 0.0
    %256 = vmatmul.mubr.f32.gmra.mrb[0].mxu0 %v82
    %v257 = vpop.f32.mrb[0].mxu0
    %v258 = vadd.f32 %v156, %v257
    %v259 = vpop.f32.mrb[0].mxu0
    %v260 = vadd.f32 %v160, %v259
    %261 = vmatprep.mubr.f32.mxu0 0.0
    %262 = vmatmul.mubr.f32.gmra.mrb[0].mxu0 %v83
    %v263 = vpop.f32.mrb[0].mxu0
    %v264 = vadd.f32 %v156, %v263
    %v265 = vpop.f32.mrb[0].mxu0
    %v266 = vadd.f32 %v160, %v265
    %267 = vmatprep.mubr.f32.mxu0 0.0
    %268 = vmatmul.mubr.f32.gmra.mrb[0].mxu0 %v84
    %v269 = vpop.f32.mrb[0].mxu0
    %v270 = vadd.f32 %v156, %v269
    %v271 = vpop.f32.mrb[0].mxu0
    %v272 = vadd.f32 %v160, %v271
    %273 = vmatprep.mubr.f32.mxu0 0.0
    %274 = vmatmul.mubr.f32.gmra.mrb[0].mxu0 %v85
    %v275 = vpop.f32.mrb[0].mxu0
    %v276 = vadd.f32 %v156, %v275
    %v277 = vpop.f32.mrb[0].mxu0
    %v278 = vadd.f32 %v160, %v277
    %279 = vmatprep.mubr.f32.mxu0 0.0
    %280 = vmatmul.mubr.f32.gmra.mrb[0].mxu0 %v86
    %v281 = vpop.f32.mrb[0].mxu0
    %v282 = vadd.f32 %v156, %v281
    %v283 = vpop.f32.mrb[0].mxu0
    %v284 = vadd.f32 %v160, %v283
    %285 = vdwg.mxu0
    %286 = vmatprep.subr.mxu0 %v90
    %287 = vmatpush1.msra.mxu0 %v89
    %288 = vmatprep.subr.mxu0 %v94
    %289 = vmatpush1.msra.mxu0 %v93
    %290 = vmatprep.subr.mxu0 %v98
    %291 = vmatpush1.msra.mxu0 %v97
    %292 = vmatprep.subr.mxu0 %v102
    %293 = vmatpush1.msra.mxu0 %v101
    %294 = vmatprep.subr.mxu0 %v106
    %295 = vmatpush1.msra.mxu0 %v105
    %296 = vmatprep.subr.mxu0 %v110
    %297 = vmatpush1.msra.mxu0 %v109
    %298 = vmatprep.subr.mxu0 %v114
    %299 = vmatpush1.msra.mxu0 %v113
    %300 = vmatprep.subr.mxu0 %v118
    %301 = vmatpush1.msra.mxu0 %v117
    %302 = vmatprep.subr.mxu0 %v122
    %303 = vmatpush1.msra.mxu0 %v121
    %304 = vmatprep.subr.mxu0 %v126
    %305 = vmatpush1.msra.mxu0 %v125
    %306 = vmatprep.subr.mxu0 %v130
    %307 = vmatpush1.msra.mxu0 %v129
    %308 = vmatprep.subr.mxu0 %v134
    %309 = vmatpush1.msra.mxu0 %v133
    %310 = vmatprep.subr.mxu0 %v138
    %311 = vmatpush1.msra.mxu0 %v137
    %312 = vmatprep.subr.mxu0 %v142
    %313 = vmatpush1.msra.mxu0 %v141
    %314 = vmatprep.subr.mxu0 %v146
    %315 = vmatpush1.msra.mxu0 %v145
    %316 = vmatprep.subr.mxu0 %v150
    %317 = vmatpush1.msra.mxu0 %v149
    %318 = vmatprep.subr.mxu0 0.0
    %319 = vmatpush1.msra.mxu0 0.0
    %320 = vmatprep.subr.mxu0 0.0
    %321 = vmatpush1.msra.mxu0 0.0
    %322 = vmatprep.subr.mxu0 0.0
    %323 = vmatpush1.msra.mxu0 0.0
    %324 = vmatprep.subr.mxu0 0.0
    %325 = vmatpush1.msra.mxu0 0.0
    %326 = vmatprep.subr.mxu0 0.0
    %327 = vmatpush1.msra.mxu0 0.0
    %328 = vmatprep.subr.mxu0 0.0
    %329 = vmatpush1.msra.mxu0 0.0
    %330 = vmatprep.subr.mxu0 0.0
    %331 = vmatpush1.msra.mxu0 0.0
    %332 = vmatprep.subr.mxu0 0.0
    %333 = vmatpush1.msra.mxu0 0.0
    %334 = vmatprep.subr.mxu0 0.0
    %335 = vmatpush1.msra.mxu0 0.0
    %336 = vmatprep.subr.mxu0 0.0
    %337 = vmatpush1.msra.mxu0 0.0
    %338 = vmatprep.subr.mxu0 0.0
    %339 = vmatpush1.msra.mxu0 0.0
    %340 = vmatprep.subr.mxu0 0.0
    %341 = vmatpush1.msra.mxu0 0.0
    %342 = vmatprep.subr.mxu0 0.0
    %343 = vmatpush1.msra.mxu0 0.0
    %344 = vmatprep.subr.mxu0 0.0
    %345 = vmatpush1.msra.mxu0 0.0
    %346 = vmatprep.subr.mxu0 0.0
    %347 = vmatpush1.msra.mxu0 0.0
    %348 = vmatprep.subr.mxu0 0.0
    %349 = vmatpush1.msra.mxu0 0.0
    %350 = vmatprep.mubr.f32.mxu0 0.0
    %351 = vmatmul.mubr.f32.gmra.mrb[0].mxu0 %v79
    %v352 = vpop.f32.mrb[0].mxu0
    %v353 = vadd.f32 %v164, %v352
    %v354 = vpop.f32.mrb[0].mxu0
    %v355 = vadd.f32 %v168, %v354
    %356 = vmatprep.mubr.f32.mxu0 0.0
    %357 = vmatmul.mubr.f32.gmra.mrb[0].mxu0 %v80
    %v358 = vpop.f32.mrb[0].mxu0
    %v359 = vadd.f32 %v164, %v358
    %v360 = vpop.f32.mrb[0].mxu0
    %v361 = vadd.f32 %v168, %v360
    %362 = vmatprep.mubr.f32.mxu0 0.0
    %363 = vmatmul.mubr.f32.gmra.mrb[0].mxu0 %v81
    %v364 = vpop.f32.mrb[0].mxu0
    %v365 = vadd.f32 %v164, %v364
    %v366 = vpop.f32.mrb[0].mxu0
    %v367 = vadd.f32 %v168, %v366
    %368 = vmatprep.mubr.f32.mxu0 0.0
    %369 = vmatmul.mubr.f32.gmra.mrb[0].mxu0 %v82
    %v370 = vpop.f32.mrb[0].mxu0
    %v371 = vadd.f32 %v164, %v370
    %v372 = vpop.f32.mrb[0].mxu0
    %v373 = vadd.f32 %v168, %v372
    %374 = vmatprep.mubr.f32.mxu0 0.0
    %375 = vmatmul.mubr.f32.gmra.mrb[0].mxu0 %v83
    %v376 = vpop.f32.mrb[0].mxu0
    %v377 = vadd.f32 %v164, %v376
    %v378 = vpop.f32.mrb[0].mxu0
    %v379 = vadd.f32 %v168, %v378
    %380 = vmatprep.mubr.f32.mxu0 0.0
    %381 = vmatmul.mubr.f32.gmra.mrb[0].mxu0 %v84
    %v382 = vpop.f32.mrb[0].mxu0
    %v383 = vadd.f32 %v164, %v382
    %v384 = vpop.f32.mrb[0].mxu0
    %v385 = vadd.f32 %v168, %v384
    %386 = vmatprep.mubr.f32.mxu0 0.0
    %387 = vmatmul.mubr.f32.gmra.mrb[0].mxu0 %v85
    %v388 = vpop.f32.mrb[0].mxu0
    %v389 = vadd.f32 %v164, %v388
    %v390 = vpop.f32.mrb[0].mxu0
    %v391 = vadd.f32 %v168, %v390
    %392 = vmatprep.mubr.f32.mxu0 0.0
    %393 = vmatmul.mubr.f32.gmra.mrb[0].mxu0 %v86
    %v394 = vpop.f32.mrb[0].mxu0
    %v395 = vadd.f32 %v164, %v394
    %v396 = vpop.f32.mrb[0].mxu0
    %v397 = vadd.f32 %v168, %v396
    %398 = vdwg.mxu0
    %399 = vst [vmem:[#allocation2] sm:$0xff] %v240
    %400 = vst [vmem:[#allocation2 + $0x8] sm:$0xff] %v242
    %401 = vst [vmem:[#allocation2 + $0x10] sm:$0xff] %v353
    %402 = vst [vmem:[#allocation2 + $0x18] sm:$0xff] %v355
    %403 = vst [vmem:[#allocation2 + $0x20] sm:$0xff] %v246
    %404 = vst [vmem:[#allocation2 + $0x28] sm:$0xff] %v248
    %405 = vst [vmem:[#allocation2 + $0x30] sm:$0xff] %v359
    %406 = vst [vmem:[#allocation2 + $0x38] sm:$0xff] %v361
    %407 = vst [vmem:[#allocation2 + $0x40] sm:$0xff] %v252
    %408 = vst [vmem:[#allocation2 + $0x48] sm:$0xff] %v254
    %409 = vst [vmem:[#allocation2 + $0x50] sm:$0xff] %v365
    %410 = vst [vmem:[#allocation2 + $0x58] sm:$0xff] %v367
    %411 = vst [vmem:[#allocation2 + $0x60] sm:$0xff] %v258
    %412 = vst [vmem:[#allocation2 + $0x68] sm:$0xff] %v260
    %413 = vst [vmem:[#allocation2 + $0x70] sm:$0xff] %v371
    %414 = vst [vmem:[#allocation2 + $0x78] sm:$0xff] %v373
    %415 = vst [vmem:[#allocation2 + $0x80] sm:$0xff] %v264
    %416 = vst [vmem:[#allocation2 + $0x88] sm:$0xff] %v266
    %417 = vst [vmem:[#allocation2 + $0x90] sm:$0xff] %v377
    %418 = vst [vmem:[#allocation2 + $0x98] sm:$0xff] %v379
    %419 = vst [vmem:[#allocation2 + $0xa0] sm:$0xff] %v270
    %420 = vst [vmem:[#allocation2 + $0xa8] sm:$0xff] %v272
    %421 = vst [vmem:[#allocation2 + $0xb0] sm:$0xff] %v383
    %422 = vst [vmem:[#allocation2 + $0xb8] sm:$0xff] %v385
    %423 = vst [vmem:[#allocation2 + $0xc0] sm:$0xff] %v276
    %424 = vst [vmem:[#allocation2 + $0xc8] sm:$0xff] %v278
    %425 = vst [vmem:[#allocation2 + $0xd0] sm:$0xff] %v389
    %426 = vst [vmem:[#allocation2 + $0xd8] sm:$0xff] %v391
    %427 = vst [vmem:[#allocation2 + $0xe0] sm:$0xff] %v282
    %428 = vst [vmem:[#allocation2 + $0xe8] sm:$0xff] %v284
    %429 = vst [vmem:[#allocation2 + $0xf0] sm:$0xff] %v395
    %430 = vst [vmem:[#allocation2 + $0xf8] sm:$0xff] %v397
    %v431 = vld [vmem:[#allocation2] sm:$0xff]
    %v432 = vld [vmem:[#allocation2 + $0x8] sm:$0xff]
    %v433 = vld [vmem:[#allocation2 + $0x10] sm:$0xff]
    %v434 = vld [vmem:[#allocation2 + $0x18] sm:$0xff]
    %v435 = vld [vmem:[#allocation8] sm:$0xff]
    %v436 = vld [vmem:[#allocation8 + $0x8] sm:$0xff]
    %v437 = vld [vmem:[#allocation8 + $0x10] sm:$0xff]
    %v438 = vld [vmem:[#allocation8 + $0x18] sm:$0xff]
    %v439 = vld [vmem:[#allocation8 + $0x20] sm:$0xff]
    %v440 = vld [vmem:[#allocation8 + $0x28] sm:$0xff]
    %v441 = vld [vmem:[#allocation8 + $0x30] sm:$0xff]
    %v442 = vld [vmem:[#allocation8 + $0x38] sm:$0xff]
    %v443 = vld [vmem:[#allocation8 + $0x40] sm:$0xff]
    %v444 = vld [vmem:[#allocation8 + $0x48] sm:$0xff]
    %v445 = vld [vmem:[#allocation8 + $0x50] sm:$0xff]
    %v446 = vld [vmem:[#allocation8 + $0x58] sm:$0xff]
    %v447 = vld [vmem:[#allocation8 + $0x60] sm:$0xff]
    %v448 = vld [vmem:[#allocation8 + $0x68] sm:$0xff]
    %v449 = vld [vmem:[#allocation8 + $0x70] sm:$0xff]
    %v450 = vld [vmem:[#allocation8 + $0x78] sm:$0xff]
    %v451 = vld [vmem:[#allocation8 + $0x80] sm:$0xff]
    %v452 = vld [vmem:[#allocation8 + $0x88] sm:$0xff]
    %v453 = vld [vmem:[#allocation8 + $0x90] sm:$0xff]
    %v454 = vld [vmem:[#allocation8 + $0x98] sm:$0xff]
    %v455 = vld [vmem:[#allocation8 + $0xa0] sm:$0xff]
    %v456 = vld [vmem:[#allocation8 + $0xa8] sm:$0xff]
    %v457 = vld [vmem:[#allocation8 + $0xb0] sm:$0xff]
    %v458 = vld [vmem:[#allocation8 + $0xb8] sm:$0xff]
    %v459 = vld [vmem:[#allocation8 + $0xc0] sm:$0xff]
    %v460 = vld [vmem:[#allocation8 + $0xc8] sm:$0xff]
    %v461 = vld [vmem:[#allocation8 + $0xd0] sm:$0xff]
    %v462 = vld [vmem:[#allocation8 + $0xd8] sm:$0xff]
    %v463 = vld [vmem:[#allocation8 + $0xe0] sm:$0xff]
    %v464 = vld [vmem:[#allocation8 + $0xe8] sm:$0xff]
    %v465 = vld [vmem:[#allocation8 + $0xf0] sm:$0xff]
    %v466 = vld [vmem:[#allocation8 + $0xf8] sm:$0xff]
    %v467 = vld [vmem:[#allocation8 + $0x100] sm:$0xff]
    %v468 = vld [vmem:[#allocation8 + $0x108] sm:$0xff]
    %v469 = vld [vmem:[#allocation8 + $0x110] sm:$0xff]
    %v470 = vld [vmem:[#allocation8 + $0x118] sm:$0xff]
    %v471 = vld [vmem:[#allocation8 + $0x120] sm:$0xff]
    %v472 = vld [vmem:[#allocation8 + $0x128] sm:$0xff]
    %v473 = vld [vmem:[#allocation8 + $0x130] sm:$0xff]
    %v474 = vld [vmem:[#allocation8 + $0x138] sm:$0xff]
    %v475 = vld [vmem:[#allocation8 + $0x140] sm:$0xff]
    %v476 = vld [vmem:[#allocation8 + $0x148] sm:$0xff]
    %v477 = vld [vmem:[#allocation8 + $0x150] sm:$0xff]
    %v478 = vld [vmem:[#allocation8 + $0x158] sm:$0xff]
    %v479 = vld [vmem:[#allocation8 + $0x160] sm:$0xff]
    %v480 = vld [vmem:[#allocation8 + $0x168] sm:$0xff]
    %v481 = vld [vmem:[#allocation8 + $0x170] sm:$0xff]
    %v482 = vld [vmem:[#allocation8 + $0x178] sm:$0xff]
    %v483 = vld [vmem:[#allocation8 + $0x180] sm:$0xff]
    %v484 = vld [vmem:[#allocation8 + $0x188] sm:$0xff]
    %v485 = vld [vmem:[#allocation8 + $0x190] sm:$0xff]
    %v486 = vld [vmem:[#allocation8 + $0x198] sm:$0xff]
    %v487 = vld [vmem:[#allocation8 + $0x1a0] sm:$0xff]
    %v488 = vld [vmem:[#allocation8 + $0x1a8] sm:$0xff]
    %v489 = vld [vmem:[#allocation8 + $0x1b0] sm:$0xff]
    %v490 = vld [vmem:[#allocation8 + $0x1b8] sm:$0xff]
    %v491 = vld [vmem:[#allocation8 + $0x1c0] sm:$0xff]
    %v492 = vld [vmem:[#allocation8 + $0x1c8] sm:$0xff]
    %v493 = vld [vmem:[#allocation8 + $0x1d0] sm:$0xff]
    %v494 = vld [vmem:[#allocation8 + $0x1d8] sm:$0xff]
    %v495 = vld [vmem:[#allocation8 + $0x1e0] sm:$0xff]
    %v496 = vld [vmem:[#allocation8 + $0x1e8] sm:$0xff]
    %v497 = vld [vmem:[#allocation8 + $0x1f0] sm:$0xff]
    %v498 = vld [vmem:[#allocation8 + $0x1f8] sm:$0xff]
    %499 = vmatprep.subr.mxu0 %v436
    %500 = vmatpush1.msra.mxu0 %v435
    %501 = vmatprep.subr.mxu0 %v440
    %502 = vmatpush1.msra.mxu0 %v439
    %503 = vmatprep.subr.mxu0 %v444
    %504 = vmatpush1.msra.mxu0 %v443
    %505 = vmatprep.subr.mxu0 %v448
    %506 = vmatpush1.msra.mxu0 %v447
    %507 = vmatprep.subr.mxu0 %v452
    %508 = vmatpush1.msra.mxu0 %v451
    %509 = vmatprep.subr.mxu0 %v456
    %510 = vmatpush1.msra.mxu0 %v455
    %511 = vmatprep.subr.mxu0 %v460
    %512 = vmatpush1.msra.mxu0 %v459
    %513 = vmatprep.subr.mxu0 %v464
    %514 = vmatpush1.msra.mxu0 %v463
    %515 = vmatprep.subr.mxu0 %v468
    %516 = vmatpush1.msra.mxu0 %v467
    %517 = vmatprep.subr.mxu0 %v472
    %518 = vmatpush1.msra.mxu0 %v471
    %519 = vmatprep.subr.mxu0 %v476
    %520 = vmatpush1.msra.mxu0 %v475
    %521 = vmatprep.subr.mxu0 %v480
    %522 = vmatpush1.msra.mxu0 %v479
    %523 = vmatprep.subr.mxu0 %v484
    %524 = vmatpush1.msra.mxu0 %v483
    %525 = vmatprep.subr.mxu0 %v488
    %526 = vmatpush1.msra.mxu0 %v487
    %527 = vmatprep.subr.mxu0 %v492
    %528 = vmatpush1.msra.mxu0 %v491
    %529 = vmatprep.subr.mxu0 %v496
    %530 = vmatpush1.msra.mxu0 %v495
    %531 = vmatprep.subr.mxu0 0.0
    %532 = vmatpush1.msra.mxu0 0.0
    %533 = vmatprep.subr.mxu0 0.0
    %534 = vmatpush1.msra.mxu0 0.0
    %535 = vmatprep.subr.mxu0 0.0
    %536 = vmatpush1.msra.mxu0 0.0
    %537 = vmatprep.subr.mxu0 0.0
    %538 = vmatpush1.msra.mxu0 0.0
    %539 = vmatprep.subr.mxu0 0.0
    %540 = vmatpush1.msra.mxu0 0.0
    %541 = vmatprep.subr.mxu0 0.0
    %542 = vmatpush1.msra.mxu0 0.0
    %543 = vmatprep.subr.mxu0 0.0
    %544 = vmatpush1.msra.mxu0 0.0
    %545 = vmatprep.subr.mxu0 0.0
    %546 = vmatpush1.msra.mxu0 0.0
    %547 = vmatprep.subr.mxu0 0.0
    %548 = vmatpush1.msra.mxu0 0.0
    %549 = vmatprep.subr.mxu0 0.0
    %550 = vmatpush1.msra.mxu0 0.0
    %551 = vmatprep.subr.mxu0 0.0
    %552 = vmatpush1.msra.mxu0 0.0
    %553 = vmatprep.subr.mxu0 0.0
    %554 = vmatpush1.msra.mxu0 0.0
    %555 = vmatprep.subr.mxu0 0.0
    %556 = vmatpush1.msra.mxu0 0.0
    %557 = vmatprep.subr.mxu0 0.0
    %558 = vmatpush1.msra.mxu0 0.0
    %559 = vmatprep.subr.mxu0 0.0
    %560 = vmatpush1.msra.mxu0 0.0
    %561 = vmatprep.subr.mxu0 0.0
    %562 = vmatpush1.msra.mxu0 0.0
    %563 = vmatprep.mubr.f32.mxu0 0.0
    %564 = vmatmul.mubr.f32.gmra.mrb[0].mxu0 0.0
    %v565 = vpop.f32.mrb[0].mxu0
    %v566 = vadd.f32 0.0, %v565
    %v567 = vpop.f32.mrb[0].mxu0
    %v568 = vadd.f32 0.0, %v567
    %569 = vdwg.mxu0
    %570 = vmatprep.subr.mxu0 %v438
    %571 = vmatpush1.msra.mxu0 %v437
    %572 = vmatprep.subr.mxu0 %v442
    %573 = vmatpush1.msra.mxu0 %v441
    %574 = vmatprep.subr.mxu0 %v446
    %575 = vmatpush1.msra.mxu0 %v445
    %576 = vmatprep.subr.mxu0 %v450
    %577 = vmatpush1.msra.mxu0 %v449
    %578 = vmatprep.subr.mxu0 %v454
    %579 = vmatpush1.msra.mxu0 %v453
    %580 = vmatprep.subr.mxu0 %v458
    %581 = vmatpush1.msra.mxu0 %v457
    %582 = vmatprep.subr.mxu0 %v462
    %583 = vmatpush1.msra.mxu0 %v461
    %584 = vmatprep.subr.mxu0 %v466
    %585 = vmatpush1.msra.mxu0 %v465
    %586 = vmatprep.subr.mxu0 %v470
    %587 = vmatpush1.msra.mxu0 %v469
    %588 = vmatprep.subr.mxu0 %v474
    %589 = vmatpush1.msra.mxu0 %v473
    %590 = vmatprep.subr.mxu0 %v478
    %591 = vmatpush1.msra.mxu0 %v477
    %592 = vmatprep.subr.mxu0 %v482
    %593 = vmatpush1.msra.mxu0 %v481
    %594 = vmatprep.subr.mxu0 %v486
    %595 = vmatpush1.msra.mxu0 %v485
    %596 = vmatprep.subr.mxu0 %v490
    %597 = vmatpush1.msra.mxu0 %v489
    %598 = vmatprep.subr.mxu0 %v494
    %599 = vmatpush1.msra.mxu0 %v493
    %600 = vmatprep.subr.mxu0 %v498
    %601 = vmatpush1.msra.mxu0 %v497
    %602 = vmatprep.subr.mxu0 0.0
    %603 = vmatpush1.msra.mxu0 0.0
    %604 = vmatprep.subr.mxu0 0.0
    %605 = vmatpush1.msra.mxu0 0.0
    %606 = vmatprep.subr.mxu0 0.0
    %607 = vmatpush1.msra.mxu0 0.0
    %608 = vmatprep.subr.mxu0 0.0
    %609 = vmatpush1.msra.mxu0 0.0
    %610 = vmatprep.subr.mxu0 0.0
    %611 = vmatpush1.msra.mxu0 0.0
    %612 = vmatprep.subr.mxu0 0.0
    %613 = vmatpush1.msra.mxu0 0.0
    %614 = vmatprep.subr.mxu0 0.0
    %615 = vmatpush1.msra.mxu0 0.0
    %616 = vmatprep.subr.mxu0 0.0
    %617 = vmatpush1.msra.mxu0 0.0
    %618 = vmatprep.subr.mxu0 0.0
    %619 = vmatpush1.msra.mxu0 0.0
    %620 = vmatprep.subr.mxu0 0.0
    %621 = vmatpush1.msra.mxu0 0.0
    %622 = vmatprep.subr.mxu0 0.0
    %623 = vmatpush1.msra.mxu0 0.0
    %624 = vmatprep.subr.mxu0 0.0
    %625 = vmatpush1.msra.mxu0 0.0
    %626 = vmatprep.subr.mxu0 0.0
    %627 = vmatpush1.msra.mxu0 0.0
    %628 = vmatprep.subr.mxu0 0.0
    %629 = vmatpush1.msra.mxu0 0.0
    %630 = vmatprep.subr.mxu0 0.0
    %631 = vmatpush1.msra.mxu0 0.0
    %632 = vmatprep.subr.mxu0 0.0
    %633 = vmatpush1.msra.mxu0 0.0
    %634 = vmatprep.mubr.f32.mxu0 0.0
    %635 = vmatmul.mubr.f32.gmra.mrb[0].mxu0 0.0
    %v636 = vpop.f32.mrb[0].mxu0
    %v637 = vadd.f32 0.0, %v636
    %v638 = vpop.f32.mrb[0].mxu0
    %v639 = vadd.f32 0.0, %v638
    %640 = vdwg.mxu0
    %v641 = vadd.f32 %v431, %v566
    %v642 = vadd.f32 %v432, %v568
    %v643 = vadd.f32 %v433, %v637
    %v644 = vadd.f32 %v434, %v639
    %v645 = vmul.f32 %v641, 0.5
    %v646 = vtanh.pop %v645
    %v647 = vmul.f32 %v646, 0.5
    %v648 = vadd.f32 %v647, 0.5
    %v649 = vmul.f32 %v642, 0.5
    %v650 = vtanh.pop %v649
    %v651 = vmul.f32 %v650, 0.5
    %v652 = vadd.f32 %v651, 0.5
    %v653 = vtanh.pop %v643
    %v654 = vmul.f32 %v644, 0.5
    %v655 = vtanh.pop %v654
    %v656 = vmul.f32 %v655, 0.5
    %v657 = vadd.f32 %v656, 0.5
    %v658 = vmul.f32 %v652, 0.0
    %v659 = vmul.f32 %v648, %v653
    %v660 = vadd.f32 %v658, %v659
    %v661 = vtanh.pop %v660
    %v662 = vmul.f32 %v657, %v661
    %v663 = vld [vmem:[#allocation2 + $0x20] sm:$0xff]
    %v664 = vld [vmem:[#allocation2 + $0x28] sm:$0xff]
    %v665 = vld [vmem:[#allocation2 + $0x30] sm:$0xff]
    %v666 = vld [vmem:[#allocation2 + $0x38] sm:$0xff]
    %667 = vmatprep.subr.mxu0 %v436
    %668 = vmatpush1.msra.mxu0 %v435
    %669 = vmatprep.subr.mxu0 %v440
    %670 = vmatpush1.msra.mxu0 %v439
    %671 = vmatprep.subr.mxu0 %v444
    %672 = vmatpush1.msra.mxu0 %v443
    %673 = vmatprep.subr.mxu0 %v448
    %674 = vmatpush1.msra.mxu0 %v447
    %675 = vmatprep.subr.mxu0 %v452
    %676 = vmatpush1.msra.mxu0 %v451
    %677 = vmatprep.subr.mxu0 %v456
    %678 = vmatpush1.msra.mxu0 %v455
    %679 = vmatprep.subr.mxu0 %v460
    %680 = vmatpush1.msra.mxu0 %v459
    %681 = vmatprep.subr.mxu0 %v464
    %682 = vmatpush1.msra.mxu0 %v463
    %683 = vmatprep.subr.mxu0 %v468
    %684 = vmatpush1.msra.mxu0 %v467
    %685 = vmatprep.subr.mxu0 %v472
    %686 = vmatpush1.msra.mxu0 %v471
    %687 = vmatprep.subr.mxu0 %v476
    %688 = vmatpush1.msra.mxu0 %v475
    %689 = vmatprep.subr.mxu0 %v480
    %690 = vmatpush1.msra.mxu0 %v479
    %691 = vmatprep.subr.mxu0 %v484
    %692 = vmatpush1.msra.mxu0 %v483
    %693 = vmatprep.subr.mxu0 %v488
    %694 = vmatpush1.msra.mxu0 %v487
    %695 = vmatprep.subr.mxu0 %v492
    %696 = vmatpush1.msra.mxu0 %v491
    %697 = vmatprep.subr.mxu0 %v496
    %698 = vmatpush1.msra.mxu0 %v495
    %699 = vmatprep.subr.mxu0 0.0
    %700 = vmatpush1.msra.mxu0 0.0
    %701 = vmatprep.subr.mxu0 0.0
    %702 = vmatpush1.msra.mxu0 0.0
    %703 = vmatprep.subr.mxu0 0.0
    %704 = vmatpush1.msra.mxu0 0.0
    %705 = vmatprep.subr.mxu0 0.0
    %706 = vmatpush1.msra.mxu0 0.0
    %707 = vmatprep.subr.mxu0 0.0
    %708 = vmatpush1.msra.mxu0 0.0
    %709 = vmatprep.subr.mxu0 0.0
    %710 = vmatpush1.msra.mxu0 0.0
    %711 = vmatprep.subr.mxu0 0.0
    %712 = vmatpush1.msra.mxu0 0.0
    %713 = vmatprep.subr.mxu0 0.0
    %714 = vmatpush1.msra.mxu0 0.0
    %715 = vmatprep.subr.mxu0 0.0
    %716 = vmatpush1.msra.mxu0 0.0
    %717 = vmatprep.subr.mxu0 0.0
    %718 = vmatpush1.msra.mxu0 0.0
    %719 = vmatprep.subr.mxu0 0.0
    %720 = vmatpush1.msra.mxu0 0.0
    %721 = vmatprep.subr.mxu0 0.0
    %722 = vmatpush1.msra.mxu0 0.0
    %723 = vmatprep.subr.mxu0 0.0
    %724 = vmatpush1.msra.mxu0 0.0
    %725 = vmatprep.subr.mxu0 0.0
    %726 = vmatpush1.msra.mxu0 0.0
    %727 = vmatprep.subr.mxu0 0.0
    %728 = vmatpush1.msra.mxu0 0.0
    %729 = vmatprep.subr.mxu0 0.0
    %730 = vmatpush1.msra.mxu0 0.0
    %731 = vmatprep.mubr.f32.mxu0 0.0
    %732 = vmatmul.mubr.f32.gmra.mrb[0].mxu0 %v662
    %v733 = vpop.f32.mrb[0].mxu0
    %v734 = vadd.f32 0.0, %v733
    %v735 = vpop.f32.mrb[0].mxu0
    %v736 = vadd.f32 0.0, %v735
    %737 = vdwg.mxu0
    %738 = vmatprep.subr.mxu0 %v438
    %739 = vmatpush1.msra.mxu0 %v437
    %740 = vmatprep.subr.mxu0 %v442
    %741 = vmatpush1.msra.mxu0 %v441
    %742 = vmatprep.subr.mxu0 %v446
    %743 = vmatpush1.msra.mxu0 %v445
    %744 = vmatprep.subr.mxu0 %v450
    %745 = vmatpush1.msra.mxu0 %v449
    %746 = vmatprep.subr.mxu0 %v454
    %747 = vmatpush1.msra.mxu0 %v453
    %748 = vmatprep.subr.mxu0 %v458
    %749 = vmatpush1.msra.mxu0 %v457
    %750 = vmatprep.subr.mxu0 %v462
    %751 = vmatpush1.msra.mxu0 %v461
    %752 = vmatprep.subr.mxu0 %v466
    %753 = vmatpush1.msra.mxu0 %v465
    %754 = vmatprep.subr.mxu0 %v470
    %755 = vmatpush1.msra.mxu0 %v469
    %756 = vmatprep.subr.mxu0 %v474
    %757 = vmatpush1.msra.mxu0 %v473
    %758 = vmatprep.subr.mxu0 %v478
    %759 = vmatpush1.msra.mxu0 %v477
    %760 = vmatprep.subr.mxu0 %v482
    %761 = vmatpush1.msra.mxu0 %v481
    %762 = vmatprep.subr.mxu0 %v486
    %763 = vmatpush1.msra.mxu0 %v485
    %764 = vmatprep.subr.mxu0 %v490
    %765 = vmatpush1.msra.mxu0 %v489
    %766 = vmatprep.subr.mxu0 %v494
    %767 = vmatpush1.msra.mxu0 %v493
    %768 = vmatprep.subr.mxu0 %v498
    %769 = vmatpush1.msra.mxu0 %v497
    %770 = vmatprep.subr.mxu0 0.0
    %771 = vmatpush1.msra.mxu0 0.0
    %772 = vmatprep.subr.mxu0 0.0
    %773 = vmatpush1.msra.mxu0 0.0
    %774 = vmatprep.subr.mxu0 0.0
    %775 = vmatpush1.msra.mxu0 0.0
    %776 = vmatprep.subr.mxu0 0.0
    %777 = vmatpush1.msra.mxu0 0.0
    %778 = vmatprep.subr.mxu0 0.0
    %779 = vmatpush1.msra.mxu0 0.0
    %780 = vmatprep.subr.mxu0 0.0
    %781 = vmatpush1.msra.mxu0 0.0
    %782 = vmatprep.subr.mxu0 0.0
    %783 = vmatpush1.msra.mxu0 0.0
    %784 = vmatprep.subr.mxu0 0.0
    %785 = vmatpush1.msra.mxu0 0.0
    %786 = vmatprep.subr.mxu0 0.0
    %787 = vmatpush1.msra.mxu0 0.0
    %788 = vmatprep.subr.mxu0 0.0
    %789 = vmatpush1.msra.mxu0 0.0
    %790 = vmatprep.subr.mxu0 0.0
    %791 = vmatpush1.msra.mxu0 0.0
    %792 = vmatprep.subr.mxu0 0.0
    %793 = vmatpush1.msra.mxu0 0.0
    %794 = vmatprep.subr.mxu0 0.0
    %795 = vmatpush1.msra.mxu0 0.0
    %796 = vmatprep.subr.mxu0 0.0
    %797 = vmatpush1.msra.mxu0 0.0
    %798 = vmatprep.subr.mxu0 0.0
    %799 = vmatpush1.msra.mxu0 0.0
    %800 = vmatprep.subr.mxu0 0.0
    %801 = vmatpush1.msra.mxu0 0.0
    %802 = vmatprep.mubr.f32.mxu0 0.0
    %803 = vmatmul.mubr.f32.gmra.mrb[0].mxu0 %v662
    %v804 = vpop.f32.mrb[0].mxu0
    %v805 = vadd.f32 0.0, %v804
    %v806 = vpop.f32.mrb[0].mxu0
    %v807 = vadd.f32 0.0, %v806
    %808 = vdwg.mxu0
    %v809 = vadd.f32 %v663, %v734
    %v810 = vadd.f32 %v664, %v736
    %v811 = vadd.f32 %v665, %v805
    %v812 = vadd.f32 %v666, %v807
    %v813 = vmul.f32 %v809, 0.5
    %v814 = vtanh.pop %v813
    %v815 = vmul.f32 %v814, 0.5
    %v816 = vadd.f32 %v815, 0.5
    %v817 = vmul.f32 %v810, 0.5
    %v818 = vtanh.pop %v817
    %v819 = vmul.f32 %v818, 0.5
    %v820 = vadd.f32 %v819, 0.5
    %v821 = vtanh.pop %v811
    %v822 = vmul.f32 %v812, 0.5
    %v823 = vtanh.pop %v822
    %v824 = vmul.f32 %v823, 0.5
    %v825 = vadd.f32 %v824, 0.5
    %v826 = vmul.f32 %v820, %v660
    %v827 = vmul.f32 %v816, %v821
    %v828 = vadd.f32 %v826, %v827
    %v829 = vtanh.pop %v828
    %v830 = vmul.f32 %v825, %v829
    %v831 = vld [vmem:[#allocation2 + $0x40] sm:$0xff]
    %v832 = vld [vmem:[#allocation2 + $0x48] sm:$0xff]
    %v833 = vld [vmem:[#allocation2 + $0x50] sm:$0xff]
    %v834 = vld [vmem:[#allocation2 + $0x58] sm:$0xff]
    %835 = vmatprep.subr.mxu0 %v436
    %836 = vmatpush1.msra.mxu0 %v435
    %837 = vmatprep.subr.mxu0 %v440
    %838 = vmatpush1.msra.mxu0 %v439
    %839 = vmatprep.subr.mxu0 %v444
    %840 = vmatpush1.msra.mxu0 %v443
    %841 = vmatprep.subr.mxu0 %v448
    %842 = vmatpush1.msra.mxu0 %v447
    %843 = vmatprep.subr.mxu0 %v452
    %844 = vmatpush1.msra.mxu0 %v451
    %845 = vmatprep.subr.mxu0 %v456
    %846 = vmatpush1.msra.mxu0 %v455
    %847 = vmatprep.subr.mxu0 %v460
    %848 = vmatpush1.msra.mxu0 %v459
    %849 = vmatprep.subr.mxu0 %v464
    %850 = vmatpush1.msra.mxu0 %v463
    %851 = vmatprep.subr.mxu0 %v468
    %852 = vmatpush1.msra.mxu0 %v467
    %853 = vmatprep.subr.mxu0 %v472
    %854 = vmatpush1.msra.mxu0 %v471
    %855 = vmatprep.subr.mxu0 %v476
    %856 = vmatpush1.msra.mxu0 %v475
    %857 = vmatprep.subr.mxu0 %v480
    %858 = vmatpush1.msra.mxu0 %v479
    %859 = vmatprep.subr.mxu0 %v484
    %860 = vmatpush1.msra.mxu0 %v483
    %861 = vmatprep.subr.mxu0 %v488
    %862 = vmatpush1.msra.mxu0 %v487
    %863 = vmatprep.subr.mxu0 %v492
    %864 = vmatpush1.msra.mxu0 %v491
    %865 = vmatprep.subr.mxu0 %v496
    %866 = vmatpush1.msra.mxu0 %v495
    %867 = vmatprep.subr.mxu0 0.0
    %868 = vmatpush1.msra.mxu0 0.0
    %869 = vmatprep.subr.mxu0 0.0
    %870 = vmatpush1.msra.mxu0 0.0
    %871 = vmatprep.subr.mxu0 0.0
    %872 = vmatpush1.msra.mxu0 0.0
    %873 = vmatprep.subr.mxu0 0.0
    %874 = vmatpush1.msra.mxu0 0.0
    %875 = vmatprep.subr.mxu0 0.0
    %876 = vmatpush1.msra.mxu0 0.0
    %877 = vmatprep.subr.mxu0 0.0
    %878 = vmatpush1.msra.mxu0 0.0
    %879 = vmatprep.subr.mxu0 0.0
    %880 = vmatpush1.msra.mxu0 0.0
    %881 = vmatprep.subr.mxu0 0.0
    %882 = vmatpush1.msra.mxu0 0.0
    %883 = vmatprep.subr.mxu0 0.0
    %884 = vmatpush1.msra.mxu0 0.0
    %885 = vmatprep.subr.mxu0 0.0
    %886 = vmatpush1.msra.mxu0 0.0
    %887 = vmatprep.subr.mxu0 0.0
    %888 = vmatpush1.msra.mxu0 0.0
    %889 = vmatprep.subr.mxu0 0.0
    %890 = vmatpush1.msra.mxu0 0.0
    %891 = vmatprep.subr.mxu0 0.0
    %892 = vmatpush1.msra.mxu0 0.0
    %893 = vmatprep.subr.mxu0 0.0
    %894 = vmatpush1.msra.mxu0 0.0
    %895 = vmatprep.subr.mxu0 0.0
    %896 = vmatpush1.msra.mxu0 0.0
    %897 = vmatprep.subr.mxu0 0.0
    %898 = vmatpush1.msra.mxu0 0.0
    %899 = vmatprep.mubr.f32.mxu0 0.0
    %900 = vmatmul.mubr.f32.gmra.mrb[0].mxu0 %v830
    %v901 = vpop.f32.mrb[0].mxu0
    %v902 = vadd.f32 0.0, %v901
    %v903 = vpop.f32.mrb[0].mxu0
    %v904 = vadd.f32 0.0, %v903
    %905 = vdwg.mxu0
    %906 = vmatprep.subr.mxu0 %v438
    %907 = vmatpush1.msra.mxu0 %v437
    %908 = vmatprep.subr.mxu0 %v442
    %909 = vmatpush1.msra.mxu0 %v441
    %910 = vmatprep.subr.mxu0 %v446
    %911 = vmatpush1.msra.mxu0 %v445
    %912 = vmatprep.subr.mxu0 %v450
    %913 = vmatpush1.msra.mxu0 %v449
    %914 = vmatprep.subr.mxu0 %v454
    %915 = vmatpush1.msra.mxu0 %v453
    %916 = vmatprep.subr.mxu0 %v458
    %917 = vmatpush1.msra.mxu0 %v457
    %918 = vmatprep.subr.mxu0 %v462
    %919 = vmatpush1.msra.mxu0 %v461
    %920 = vmatprep.subr.mxu0 %v466
    %921 = vmatpush1.msra.mxu0 %v465
    %922 = vmatprep.subr.mxu0 %v470
    %923 = vmatpush1.msra.mxu0 %v469
    %924 = vmatprep.subr.mxu0 %v474
    %925 = vmatpush1.msra.mxu0 %v473
    %926 = vmatprep.subr.mxu0 %v478
    %927 = vmatpush1.msra.mxu0 %v477
    %928 = vmatprep.subr.mxu0 %v482
    %929 = vmatpush1.msra.mxu0 %v481
    %930 = vmatprep.subr.mxu0 %v486
    %931 = vmatpush1.msra.mxu0 %v485
    %932 = vmatprep.subr.mxu0 %v490
    %933 = vmatpush1.msra.mxu0 %v489
    %934 = vmatprep.subr.mxu0 %v494
    %935 = vmatpush1.msra.mxu0 %v493
    %936 = vmatprep.subr.mxu0 %v498
    %937 = vmatpush1.msra.mxu0 %v497
    %938 = vmatprep.subr.mxu0 0.0
    %939 = vmatpush1.msra.mxu0 0.0
    %940 = vmatprep.subr.mxu0 0.0
    %941 = vmatpush1.msra.mxu0 0.0
    %942 = vmatprep.subr.mxu0 0.0
    %943 = vmatpush1.msra.mxu0 0.0
    %944 = vmatprep.subr.mxu0 0.0
    %945 = vmatpush1.msra.mxu0 0.0
    %946 = vmatprep.subr.mxu0 0.0
    %947 = vmatpush1.msra.mxu0 0.0
    %948 = vmatprep.subr.mxu0 0.0
    %949 = vmatpush1.msra.mxu0 0.0
    %950 = vmatprep.subr.mxu0 0.0
    %951 = vmatpush1.msra.mxu0 0.0
    %952 = vmatprep.subr.mxu0 0.0
    %953 = vmatpush1.msra.mxu0 0.0
    %954 = vmatprep.subr.mxu0 0.0
    %955 = vmatpush1.msra.mxu0 0.0
    %956 = vmatprep.subr.mxu0 0.0
    %957 = vmatpush1.msra.mxu0 0.0
    %958 = vmatprep.subr.mxu0 0.0
    %959 = vmatpush1.msra.mxu0 0.0
    %960 = vmatprep.subr.mxu0 0.0
    %961 = vmatpush1.msra.mxu0 0.0
    %962 = vmatprep.subr.mxu0 0.0
    %963 = vmatpush1.msra.mxu0 0.0
    %964 = vmatprep.subr.mxu0 0.0
    %965 = vmatpush1.msra.mxu0 0.0
    %966 = vmatprep.subr.mxu0 0.0
    %967 = vmatpush1.msra.mxu0 0.0
    %968 = vmatprep.subr.mxu0 0.0
    %969 = vmatpush1.msra.mxu0 0.0
    %970 = vmatprep.mubr.f32.mxu0 0.0
    %971 = vmatmul.mubr.f32.gmra.mrb[0].mxu0 %v830
    %v972 = vpop.f32.mrb[0].mxu0
    %v973 = vadd.f32 0.0, %v972
    %v974 = vpop.f32.mrb[0].mxu0
    %v975 = vadd.f32 0.0, %v974
    %976 = vdwg.mxu0
    %v977 = vadd.f32 %v831, %v902
    %v978 = vadd.f32 %v832, %v904
    %v979 = vadd.f32 %v833, %v973
    %v980 = vadd.f32 %v834, %v975
    %v981 = vmul.f32 %v977, 0.5
    %v982 = vtanh.pop %v981
    %v983 = vmul.f32 %v982, 0.5
    %v984 = vadd.f32 %v983, 0.5
    %v985 = vmul.f32 %v978, 0.5
    %v986 = vtanh.pop %v985
    %v987 = vmul.f32 %v986, 0.5
    %v988 = vadd.f32 %v987, 0.5
    %v989 = vtanh.pop %v979
    %v990 = vmul.f32 %v980, 0.5
    %v991 = vtanh.pop %v990
    %v992 = vmul.f32 %v991, 0.5
    %v993 = vadd.f32 %v992, 0.5
    %v994 = vmul.f32 %v988, %v828
    %v995 = vmul.f32 %v984, %v989
    %v996 = vadd.f32 %v994, %v995
    %v997 = vtanh.pop %v996
    %v998 = vmul.f32 %v993, %v997
    %v999 = vld [vmem:[#allocation2 + $0x60] sm:$0xff]
    %v1000 = vld [vmem:[#allocation2 + $0x68] sm:$0xff]
    %v1001 = vld [vmem:[#allocation2 + $0x70] sm:$0xff]
    %v1002 = vld [vmem:[#allocation2 + $0x78] sm:$0xff]
    %1003 = vmatprep.subr.mxu0 %v436
    %1004 = vmatpush1.msra.mxu0 %v435
    %1005 = vmatprep.subr.mxu0 %v440
    %1006 = vmatpush1.msra.mxu0 %v439
    %1007 = vmatprep.subr.mxu0 %v444
    %1008 = vmatpush1.msra.mxu0 %v443
    %1009 = vmatprep.subr.mxu0 %v448
    %1010 = vmatpush1.msra.mxu0 %v447
    %1011 = vmatprep.subr.mxu0 %v452
    %1012 = vmatpush1.msra.mxu0 %v451
    %1013 = vmatprep.subr.mxu0 %v456
    %1014 = vmatpush1.msra.mxu0 %v455
    %1015 = vmatprep.subr.mxu0 %v460
    %1016 = vmatpush1.msra.mxu0 %v459
    %1017 = vmatprep.subr.mxu0 %v464
    %1018 = vmatpush1.msra.mxu0 %v463
    %1019 = vmatprep.subr.mxu0 %v468
    %1020 = vmatpush1.msra.mxu0 %v467
    %1021 = vmatprep.subr.mxu0 %v472
    %1022 = vmatpush1.msra.mxu0 %v471
    %1023 = vmatprep.subr.mxu0 %v476
    %1024 = vmatpush1.msra.mxu0 %v475
    %1025 = vmatprep.subr.mxu0 %v480
    %1026 = vmatpush1.msra.mxu0 %v479
    %1027 = vmatprep.subr.mxu0 %v484
    %1028 = vmatpush1.msra.mxu0 %v483
    %1029 = vmatprep.subr.mxu0 %v488
    %1030 = vmatpush1.msra.mxu0 %v487
    %1031 = vmatprep.subr.mxu0 %v492
    %1032 = vmatpush1.msra.mxu0 %v491
    %1033 = vmatprep.subr.mxu0 %v496
    %1034 = vmatpush1.msra.mxu0 %v495
    %1035 = vmatprep.subr.mxu0 0.0
    %1036 = vmatpush1.msra.mxu0 0.0
    %1037 = vmatprep.subr.mxu0 0.0
    %1038 = vmatpush1.msra.mxu0 0.0
    %1039 = vmatprep.subr.mxu0 0.0
    %1040 = vmatpush1.msra.mxu0 0.0
    %1041 = vmatprep.subr.mxu0 0.0
    %1042 = vmatpush1.msra.mxu0 0.0
    %1043 = vmatprep.subr.mxu0 0.0
    %1044 = vmatpush1.msra.mxu0 0.0
    %1045 = vmatprep.subr.mxu0 0.0
    %1046 = vmatpush1.msra.mxu0 0.0
    %1047 = vmatprep.subr.mxu0 0.0
    %1048 = vmatpush1.msra.mxu0 0.0
    %1049 = vmatprep.subr.mxu0 0.0
    %1050 = vmatpush1.msra.mxu0 0.0
    %1051 = vmatprep.subr.mxu0 0.0
    %1052 = vmatpush1.msra.mxu0 0.0
    %1053 = vmatprep.subr.mxu0 0.0
    %1054 = vmatpush1.msra.mxu0 0.0
    %1055 = vmatprep.subr.mxu0 0.0
    %1056 = vmatpush1.msra.mxu0 0.0
    %1057 = vmatprep.subr.mxu0 0.0
    %1058 = vmatpush1.msra.mxu0 0.0
    %1059 = vmatprep.subr.mxu0 0.0
    %1060 = vmatpush1.msra.mxu0 0.0
    %1061 = vmatprep.subr.mxu0 0.0
    %1062 = vmatpush1.msra.mxu0 0.0
    %1063 = vmatprep.subr.mxu0 0.0
    %1064 = vmatpush1.msra.mxu0 0.0
    %1065 = vmatprep.subr.mxu0 0.0
    %1066 = vmatpush1.msra.mxu0 0.0
    %1067 = vmatprep.mubr.f32.mxu0 0.0
    %1068 = vmatmul.mubr.f32.gmra.mrb[0].mxu0 %v998
    %v1069 = vpop.f32.mrb[0].mxu0
    %v1070 = vadd.f32 0.0, %v1069
    %v1071 = vpop.f32.mrb[0].mxu0
    %v1072 = vadd.f32 0.0, %v1071
    %1073 = vdwg.mxu0
    %1074 = vmatprep.subr.mxu0 %v438
    %1075 = vmatpush1.msra.mxu0 %v437
    %1076 = vmatprep.subr.mxu0 %v442
    %1077 = vmatpush1.msra.mxu0 %v441
    %1078 = vmatprep.subr.mxu0 %v446
    %1079 = vmatpush1.msra.mxu0 %v445
    %1080 = vmatprep.subr.mxu0 %v450
    %1081 = vmatpush1.msra.mxu0 %v449
    %1082 = vmatprep.subr.mxu0 %v454
    %1083 = vmatpush1.msra.mxu0 %v453
    %1084 = vmatprep.subr.mxu0 %v458
    %1085 = vmatpush1.msra.mxu0 %v457
    %1086 = vmatprep.subr.mxu0 %v462
    %1087 = vmatpush1.msra.mxu0 %v461
    %1088 = vmatprep.subr.mxu0 %v466
    %1089 = vmatpush1.msra.mxu0 %v465
    %1090 = vmatprep.subr.mxu0 %v470
    %1091 = vmatpush1.msra.mxu0 %v469
    %1092 = vmatprep.subr.mxu0 %v474
    %1093 = vmatpush1.msra.mxu0 %v473
    %1094 = vmatprep.subr.mxu0 %v478
    %1095 = vmatpush1.msra.mxu0 %v477
    %1096 = vmatprep.subr.mxu0 %v482
    %1097 = vmatpush1.msra.mxu0 %v481
    %1098 = vmatprep.subr.mxu0 %v486
    %1099 = vmatpush1.msra.mxu0 %v485
    %1100 = vmatprep.subr.mxu0 %v490
    %1101 = vmatpush1.msra.mxu0 %v489
    %1102 = vmatprep.subr.mxu0 %v494
    %1103 = vmatpush1.msra.mxu0 %v493
    %1104 = vmatprep.subr.mxu0 %v498
    %1105 = vmatpush1.msra.mxu0 %v497
    %1106 = vmatprep.subr.mxu0 0.0
    %1107 = vmatpush1.msra.mxu0 0.0
    %1108 = vmatprep.subr.mxu0 0.0
    %1109 = vmatpush1.msra.mxu0 0.0
    %1110 = vmatprep.subr.mxu0 0.0
    %1111 = vmatpush1.msra.mxu0 0.0
    %1112 = vmatprep.subr.mxu0 0.0
    %1113 = vmatpush1.msra.mxu0 0.0
    %1114 = vmatprep.subr.mxu0 0.0
    %1115 = vmatpush1.msra.mxu0 0.0
    %1116 = vmatprep.subr.mxu0 0.0
    %1117 = vmatpush1.msra.mxu0 0.0
    %1118 = vmatprep.subr.mxu0 0.0
    %1119 = vmatpush1.msra.mxu0 0.0
    %1120 = vmatprep.subr.mxu0 0.0
    %1121 = vmatpush1.msra.mxu0 0.0
    %1122 = vmatprep.subr.mxu0 0.0
    %1123 = vmatpush1.msra.mxu0 0.0
    %1124 = vmatprep.subr.mxu0 0.0
    %1125 = vmatpush1.msra.mxu0 0.0
    %1126 = vmatprep.subr.mxu0 0.0
    %1127 = vmatpush1.msra.mxu0 0.0
    %1128 = vmatprep.subr.mxu0 0.0
    %1129 = vmatpush1.msra.mxu0 0.0
    %1130 = vmatprep.subr.mxu0 0.0
    %1131 = vmatpush1.msra.mxu0 0.0
    %1132 = vmatprep.subr.mxu0 0.0
    %1133 = vmatpush1.msra.mxu0 0.0
    %1134 = vmatprep.subr.mxu0 0.0
    %1135 = vmatpush1.msra.mxu0 0.0
    %1136 = vmatprep.subr.mxu0 0.0
    %1137 = vmatpush1.msra.mxu0 0.0
    %1138 = vmatprep.mubr.f32.mxu0 0.0
    %1139 = vmatmul.mubr.f32.gmra.mrb[0].mxu0 %v998
    %v1140 = vpop.f32.mrb[0].mxu0
    %v1141 = vadd.f32 0.0, %v1140
    %v1142 = vpop.f32.mrb[0].mxu0
    %v1143 = vadd.f32 0.0, %v1142
    %1144 = vdwg.mxu0
    %v1145 = vadd.f32 %v999, %v1070
    %v1146 = vadd.f32 %v1000, %v1072
    %v1147 = vadd.f32 %v1001, %v1141
    %v1148 = vadd.f32 %v1002, %v1143
    %v1149 = vmul.f32 %v1145, 0.5
    %v1150 = vtanh.pop %v1149
    %v1151 = vmul.f32 %v1150, 0.5
    %v1152 = vadd.f32 %v1151, 0.5
    %v1153 = vmul.f32 %v1146, 0.5
    %v1154 = vtanh.pop %v1153
    %v1155 = vmul.f32 %v1154, 0.5
    %v1156 = vadd.f32 %v1155, 0.5
    %v1157 = vtanh.pop %v1147
    %v1158 = vmul.f32 %v1148, 0.5
    %v1159 = vtanh.pop %v1158
    %v1160 = vmul.f32 %v1159, 0.5
    %v1161 = vadd.f32 %v1160, 0.5
    %v1162 = vmul.f32 %v1156, %v996
    %v1163 = vmul.f32 %v1152, %v1157
    %v1164 = vadd.f32 %v1162, %v1163
    %v1165 = vtanh.pop %v1164
    %v1166 = vmul.f32 %v1161, %v1165
    %v1167 = vld [vmem:[#allocation2 + $0x80] sm:$0xff]
    %v1168 = vld [vmem:[#allocation2 + $0x88] sm:$0xff]
    %v1169 = vld [vmem:[#allocation2 + $0x90] sm:$0xff]
    %v1170 = vld [vmem:[#allocation2 + $0x98] sm:$0xff]
    %1171 = vmatprep.subr.mxu0 %v436
    %1172 = vmatpush1.msra.mxu0 %v435
    %1173 = vmatprep.subr.mxu0 %v440
    %1174 = vmatpush1.msra.mxu0 %v439
    %1175 = vmatprep.subr.mxu0 %v444
    %1176 = vmatpush1.msra.mxu0 %v443
    %1177 = vmatprep.subr.mxu0 %v448
    %1178 = vmatpush1.msra.mxu0 %v447
    %1179 = vmatprep.subr.mxu0 %v452
    %1180 = vmatpush1.msra.mxu0 %v451
    %1181 = vmatprep.subr.mxu0 %v456
    %1182 = vmatpush1.msra.mxu0 %v455
    %1183 = vmatprep.subr.mxu0 %v460
    %1184 = vmatpush1.msra.mxu0 %v459
    %1185 = vmatprep.subr.mxu0 %v464
    %1186 = vmatpush1.msra.mxu0 %v463
    %1187 = vmatprep.subr.mxu0 %v468
    %1188 = vmatpush1.msra.mxu0 %v467
    %1189 = vmatprep.subr.mxu0 %v472
    %1190 = vmatpush1.msra.mxu0 %v471
    %1191 = vmatprep.subr.mxu0 %v476
    %1192 = vmatpush1.msra.mxu0 %v475
    %1193 = vmatprep.subr.mxu0 %v480
    %1194 = vmatpush1.msra.mxu0 %v479
    %1195 = vmatprep.subr.mxu0 %v484
    %1196 = vmatpush1.msra.mxu0 %v483
    %1197 = vmatprep.subr.mxu0 %v488
    %1198 = vmatpush1.msra.mxu0 %v487
    %1199 = vmatprep.subr.mxu0 %v492
    %1200 = vmatpush1.msra.mxu0 %v491
    %1201 = vmatprep.subr.mxu0 %v496
    %1202 = vmatpush1.msra.mxu0 %v495
    %1203 = vmatprep.subr.mxu0 0.0
    %1204 = vmatpush1.msra.mxu0 0.0
    %1205 = vmatprep.subr.mxu0 0.0
    %1206 = vmatpush1.msra.mxu0 0.0
    %1207 = vmatprep.subr.mxu0 0.0
    %1208 = vmatpush1.msra.mxu0 0.0
    %1209 = vmatprep.subr.mxu0 0.0
    %1210 = vmatpush1.msra.mxu0 0.0
    %1211 = vmatprep.subr.mxu0 0.0
    %1212 = vmatpush1.msra.mxu0 0.0
    %1213 = vmatprep.subr.mxu0 0.0
    %1214 = vmatpush1.msra.mxu0 0.0
    %1215 = vmatprep.subr.mxu0 0.0
    %1216 = vmatpush1.msra.mxu0 0.0
    %1217 = vmatprep.subr.mxu0 0.0
    %1218 = vmatpush1.msra.mxu0 0.0
    %1219 = vmatprep.subr.mxu0 0.0
    %1220 = vmatpush1.msra.mxu0 0.0
    %1221 = vmatprep.subr.mxu0 0.0
    %1222 = vmatpush1.msra.mxu0 0.0
    %1223 = vmatprep.subr.mxu0 0.0
    %1224 = vmatpush1.msra.mxu0 0.0
    %1225 = vmatprep.subr.mxu0 0.0
    %1226 = vmatpush1.msra.mxu0 0.0
    %1227 = vmatprep.subr.mxu0 0.0
    %1228 = vmatpush1.msra.mxu0 0.0
    %1229 = vmatprep.subr.mxu0 0.0
    %1230 = vmatpush1.msra.mxu0 0.0
    %1231 = vmatprep.subr.mxu0 0.0
    %1232 = vmatpush1.msra.mxu0 0.0
    %1233 = vmatprep.subr.mxu0 0.0
    %1234 = vmatpush1.msra.mxu0 0.0
    %1235 = vmatprep.mubr.f32.mxu0 0.0
    %1236 = vmatmul.mubr.f32.gmra.mrb[0].mxu0 %v1166
    %v1237 = vpop.f32.mrb[0].mxu0
    %v1238 = vadd.f32 0.0, %v1237
    %v1239 = vpop.f32.mrb[0].mxu0
    %v1240 = vadd.f32 0.0, %v1239
    %1241 = vdwg.mxu0
    %1242 = vmatprep.subr.mxu0 %v438
    %1243 = vmatpush1.msra.mxu0 %v437
    %1244 = vmatprep.subr.mxu0 %v442
    %1245 = vmatpush1.msra.mxu0 %v441
    %1246 = vmatprep.subr.mxu0 %v446
    %1247 = vmatpush1.msra.mxu0 %v445
    %1248 = vmatprep.subr.mxu0 %v450
    %1249 = vmatpush1.msra.mxu0 %v449
    %1250 = vmatprep.subr.mxu0 %v454
    %1251 = vmatpush1.msra.mxu0 %v453
    %1252 = vmatprep.subr.mxu0 %v458
    %1253 = vmatpush1.msra.mxu0 %v457
    %1254 = vmatprep.subr.mxu0 %v462
    %1255 = vmatpush1.msra.mxu0 %v461
    %1256 = vmatprep.subr.mxu0 %v466
    %1257 = vmatpush1.msra.mxu0 %v465
    %1258 = vmatprep.subr.mxu0 %v470
    %1259 = vmatpush1.msra.mxu0 %v469
    %1260 = vmatprep.subr.mxu0 %v474
    %1261 = vmatpush1.msra.mxu0 %v473
    %1262 = vmatprep.subr.mxu0 %v478
    %1263 = vmatpush1.msra.mxu0 %v477
    %1264 = vmatprep.subr.mxu0 %v482
    %1265 = vmatpush1.msra.mxu0 %v481
    %1266 = vmatprep.subr.mxu0 %v486
    %1267 = vmatpush1.msra.mxu0 %v485
    %1268 = vmatprep.subr.mxu0 %v490
    %1269 = vmatpush1.msra.mxu0 %v489
    %1270 = vmatprep.subr.mxu0 %v494
    %1271 = vmatpush1.msra.mxu0 %v493
    %1272 = vmatprep.subr.mxu0 %v498
    %1273 = vmatpush1.msra.mxu0 %v497
    %1274 = vmatprep.subr.mxu0 0.0
    %1275 = vmatpush1.msra.mxu0 0.0
    %1276 = vmatprep.subr.mxu0 0.0
    %1277 = vmatpush1.msra.mxu0 0.0
    %1278 = vmatprep.subr.mxu0 0.0
    %1279 = vmatpush1.msra.mxu0 0.0
    %1280 = vmatprep.subr.mxu0 0.0
    %1281 = vmatpush1.msra.mxu0 0.0
    %1282 = vmatprep.subr.mxu0 0.0
    %1283 = vmatpush1.msra.mxu0 0.0
    %1284 = vmatprep.subr.mxu0 0.0
    %1285 = vmatpush1.msra.mxu0 0.0
    %1286 = vmatprep.subr.mxu0 0.0
    %1287 = vmatpush1.msra.mxu0 0.0
    %1288 = vmatprep.subr.mxu0 0.0
    %1289 = vmatpush1.msra.mxu0 0.0
    %1290 = vmatprep.subr.mxu0 0.0
    %1291 = vmatpush1.msra.mxu0 0.0
    %1292 = vmatprep.subr.mxu0 0.0
    %1293 = vmatpush1.msra.mxu0 0.0
    %1294 = vmatprep.subr.mxu0 0.0
    %1295 = vmatpush1.msra.mxu0 0.0
    %1296 = vmatprep.subr.mxu0 0.0
    %1297 = vmatpush1.msra.mxu0 0.0
    %1298 = vmatprep.subr.mxu0 0.0
    %1299 = vmatpush1.msra.mxu0 0.0
    %1300 = vmatprep.subr.mxu0 0.0
    %1301 = vmatpush1.msra.mxu0 0.0
    %1302 = vmatprep.subr.mxu0 0.0
    %1303 = vmatpush1.msra.mxu0 0.0
    %1304 = vmatprep.subr.mxu0 0.0
    %1305 = vmatpush1.msra.mxu0 0.0
    %1306 = vmatprep.mubr.f32.mxu0 0.0
    %1307 = vmatmul.mubr.f32.gmra.mrb[0].mxu0 %v1166
    %v1308 = vpop.f32.mrb[0].mxu0
    %v1309 = vadd.f32 0.0, %v1308
    %v1310 = vpop.f32.mrb[0].mxu0
    %v1311 = vadd.f32 0.0, %v1310
    %1312 = vdwg.mxu0
    %v1313 = vadd.f32 %v1167, %v1238
    %v1314 = vadd.f32 %v1168, %v1240
    %v1315 = vadd.f32 %v1169, %v1309
    %v1316 = vadd.f32 %v1170, %v1311
    %v1317 = vmul.f32 %v1313, 0.5
    %v1318 = vtanh.pop %v1317
    %v1319 = vmul.f32 %v1318, 0.5
    %v1320 = vadd.f32 %v1319, 0.5
    %v1321 = vmul.f32 %v1314, 0.5
    %v1322 = vtanh.pop %v1321
    %v1323 = vmul.f32 %v1322, 0.5
    %v1324 = vadd.f32 %v1323, 0.5
    %v1325 = vtanh.pop %v1315
    %v1326 = vmul.f32 %v1316, 0.5
    %v1327 = vtanh.pop %v1326
    %v1328 = vmul.f32 %v1327, 0.5
    %v1329 = vadd.f32 %v1328, 0.5
    %v1330 = vmul.f32 %v1324, %v1164
    %v1331 = vmul.f32 %v1320, %v1325
    %v1332 = vadd.f32 %v1330, %v1331
    %v1333 = vtanh.pop %v1332
    %v1334 = vmul.f32 %v1329, %v1333
    %v1335 = vld [vmem:[#allocation2 + $0xa0] sm:$0xff]
    %v1336 = vld [vmem:[#allocation2 + $0xa8] sm:$0xff]
    %v1337 = vld [vmem:[#allocation2 + $0xb0] sm:$0xff]
    %v1338 = vld [vmem:[#allocation2 + $0xb8] sm:$0xff]
    %1339 = vmatprep.subr.mxu0 %v436
    %1340 = vmatpush1.msra.mxu0 %v435
    %1341 = vmatprep.subr.mxu0 %v440
    %1342 = vmatpush1.msra.mxu0 %v439
    %1343 = vmatprep.subr.mxu0 %v444
    %1344 = vmatpush1.msra.mxu0 %v443
    %1345 = vmatprep.subr.mxu0 %v448
    %1346 = vmatpush1.msra.mxu0 %v447
    %1347 = vmatprep.subr.mxu0 %v452
    %1348 = vmatpush1.msra.mxu0 %v451
    %1349 = vmatprep.subr.mxu0 %v456
    %1350 = vmatpush1.msra.mxu0 %v455
    %1351 = vmatprep.subr.mxu0 %v460
    %1352 = vmatpush1.msra.mxu0 %v459
    %1353 = vmatprep.subr.mxu0 %v464
    %1354 = vmatpush1.msra.mxu0 %v463
    %1355 = vmatprep.subr.mxu0 %v468
    %1356 = vmatpush1.msra.mxu0 %v467
    %1357 = vmatprep.subr.mxu0 %v472
    %1358 = vmatpush1.msra.mxu0 %v471
    %1359 = vmatprep.subr.mxu0 %v476
    %1360 = vmatpush1.msra.mxu0 %v475
    %1361 = vmatprep.subr.mxu0 %v480
    %1362 = vmatpush1.msra.mxu0 %v479
    %1363 = vmatprep.subr.mxu0 %v484
    %1364 = vmatpush1.msra.mxu0 %v483
    %1365 = vmatprep.subr.mxu0 %v488
    %1366 = vmatpush1.msra.mxu0 %v487
    %1367 = vmatprep.subr.mxu0 %v492
    %1368 = vmatpush1.msra.mxu0 %v491
    %1369 = vmatprep.subr.mxu0 %v496
    %1370 = vmatpush1.msra.mxu0 %v495
    %1371 = vmatprep.subr.mxu0 0.0
    %1372 = vmatpush1.msra.mxu0 0.0
    %1373 = vmatprep.subr.mxu0 0.0
    %1374 = vmatpush1.msra.mxu0 0.0
    %1375 = vmatprep.subr.mxu0 0.0
    %1376 = vmatpush1.msra.mxu0 0.0
    %1377 = vmatprep.subr.mxu0 0.0
    %1378 = vmatpush1.msra.mxu0 0.0
    %1379 = vmatprep.subr.mxu0 0.0
    %1380 = vmatpush1.msra.mxu0 0.0
    %1381 = vmatprep.subr.mxu0 0.0
    %1382 = vmatpush1.msra.mxu0 0.0
    %1383 = vmatprep.subr.mxu0 0.0
    %1384 = vmatpush1.msra.mxu0 0.0
    %1385 = vmatprep.subr.mxu0 0.0
    %1386 = vmatpush1.msra.mxu0 0.0
    %1387 = vmatprep.subr.mxu0 0.0
    %1388 = vmatpush1.msra.mxu0 0.0
    %1389 = vmatprep.subr.mxu0 0.0
    %1390 = vmatpush1.msra.mxu0 0.0
    %1391 = vmatprep.subr.mxu0 0.0
    %1392 = vmatpush1.msra.mxu0 0.0
    %1393 = vmatprep.subr.mxu0 0.0
    %1394 = vmatpush1.msra.mxu0 0.0
    %1395 = vmatprep.subr.mxu0 0.0
    %1396 = vmatpush1.msra.mxu0 0.0
    %1397 = vmatprep.subr.mxu0 0.0
    %1398 = vmatpush1.msra.mxu0 0.0
    %1399 = vmatprep.subr.mxu0 0.0
    %1400 = vmatpush1.msra.mxu0 0.0
    %1401 = vmatprep.subr.mxu0 0.0
    %1402 = vmatpush1.msra.mxu0 0.0
    %1403 = vmatprep.mubr.f32.mxu0 0.0
    %1404 = vmatmul.mubr.f32.gmra.mrb[0].mxu0 %v1334
    %v1405 = vpop.f32.mrb[0].mxu0
    %v1406 = vadd.f32 0.0, %v1405
    %v1407 = vpop.f32.mrb[0].mxu0
    %v1408 = vadd.f32 0.0, %v1407
    %1409 = vdwg.mxu0
    %1410 = vmatprep.subr.mxu0 %v438
    %1411 = vmatpush1.msra.mxu0 %v437
    %1412 = vmatprep.subr.mxu0 %v442
    %1413 = vmatpush1.msra.mxu0 %v441
    %1414 = vmatprep.subr.mxu0 %v446
    %1415 = vmatpush1.msra.mxu0 %v445
    %1416 = vmatprep.subr.mxu0 %v450
    %1417 = vmatpush1.msra.mxu0 %v449
    %1418 = vmatprep.subr.mxu0 %v454
    %1419 = vmatpush1.msra.mxu0 %v453
    %1420 = vmatprep.subr.mxu0 %v458
    %1421 = vmatpush1.msra.mxu0 %v457
    %1422 = vmatprep.subr.mxu0 %v462
    %1423 = vmatpush1.msra.mxu0 %v461
    %1424 = vmatprep.subr.mxu0 %v466
    %1425 = vmatpush1.msra.mxu0 %v465
    %1426 = vmatprep.subr.mxu0 %v470
    %1427 = vmatpush1.msra.mxu0 %v469
    %1428 = vmatprep.subr.mxu0 %v474
    %1429 = vmatpush1.msra.mxu0 %v473
    %1430 = vmatprep.subr.mxu0 %v478
    %1431 = vmatpush1.msra.mxu0 %v477
    %1432 = vmatprep.subr.mxu0 %v482
    %1433 = vmatpush1.msra.mxu0 %v481
    %1434 = vmatprep.subr.mxu0 %v486
    %1435 = vmatpush1.msra.mxu0 %v485
    %1436 = vmatprep.subr.mxu0 %v490
    %1437 = vmatpush1.msra.mxu0 %v489
    %1438 = vmatprep.subr.mxu0 %v494
    %1439 = vmatpush1.msra.mxu0 %v493
    %1440 = vmatprep.subr.mxu0 %v498
    %1441 = vmatpush1.msra.mxu0 %v497
    %1442 = vmatprep.subr.mxu0 0.0
    %1443 = vmatpush1.msra.mxu0 0.0
    %1444 = vmatprep.subr.mxu0 0.0
    %1445 = vmatpush1.msra.mxu0 0.0
    %1446 = vmatprep.subr.mxu0 0.0
    %1447 = vmatpush1.msra.mxu0 0.0
    %1448 = vmatprep.subr.mxu0 0.0
    %1449 = vmatpush1.msra.mxu0 0.0
    %1450 = vmatprep.subr.mxu0 0.0
    %1451 = vmatpush1.msra.mxu0 0.0
    %1452 = vmatprep.subr.mxu0 0.0
    %1453 = vmatpush1.msra.mxu0 0.0
    %1454 = vmatprep.subr.mxu0 0.0
    %1455 = vmatpush1.msra.mxu0 0.0
    %1456 = vmatprep.subr.mxu0 0.0
    %1457 = vmatpush1.msra.mxu0 0.0
    %1458 = vmatprep.subr.mxu0 0.0
    %1459 = vmatpush1.msra.mxu0 0.0
    %1460 = vmatprep.subr.mxu0 0.0
    %1461 = vmatpush1.msra.mxu0 0.0
    %1462 = vmatprep.subr.mxu0 0.0
    %1463 = vmatpush1.msra.mxu0 0.0
    %1464 = vmatprep.subr.mxu0 0.0
    %1465 = vmatpush1.msra.mxu0 0.0
    %1466 = vmatprep.subr.mxu0 0.0
    %1467 = vmatpush1.msra.mxu0 0.0
    %1468 = vmatprep.subr.mxu0 0.0
    %1469 = vmatpush1.msra.mxu0 0.0
    %1470 = vmatprep.subr.mxu0 0.0
    %1471 = vmatpush1.msra.mxu0 0.0
    %1472 = vmatprep.subr.mxu0 0.0
    %1473 = vmatpush1.msra.mxu0 0.0
    %1474 = vmatprep.mubr.f32.mxu0 0.0
    %1475 = vmatmul.mubr.f32.gmra.mrb[0].mxu0 %v1334
    %v1476 = vpop.f32.mrb[0].mxu0
    %v1477 = vadd.f32 0.0, %v1476
    %v1478 = vpop.f32.mrb[0].mxu0
    %v1479 = vadd.f32 0.0, %v1478
    %1480 = vdwg.mxu0
    %v1481 = vadd.f32 %v1335, %v1406
    %v1482 = vadd.f32 %v1336, %v1408
    %v1483 = vadd.f32 %v1337, %v1477
    %v1484 = vadd.f32 %v1338, %v1479
    %v1485 = vmul.f32 %v1481, 0.5
    %v1486 = vtanh.pop %v1485
    %v1487 = vmul.f32 %v1486, 0.5
    %v1488 = vadd.f32 %v1487, 0.5
    %v1489 = vmul.f32 %v1482, 0.5
    %v1490 = vtanh.pop %v1489
    %v1491 = vmul.f32 %v1490, 0.5
    %v1492 = vadd.f32 %v1491, 0.5
    %v1493 = vtanh.pop %v1483
    %v1494 = vmul.f32 %v1484, 0.5
    %v1495 = vtanh.pop %v1494
    %v1496 = vmul.f32 %v1495, 0.5
    %v1497 = vadd.f32 %v1496, 0.5
    %v1498 = vmul.f32 %v1492, %v1332
    %v1499 = vmul.f32 %v1488, %v1493
    %v1500 = vadd.f32 %v1498, %v1499
    %v1501 = vtanh.pop %v1500
    %v1502 = vmul.f32 %v1497, %v1501
    %v1503 = vld [vmem:[#allocation2 + $0xc0] sm:$0xff]
    %v1504 = vld [vmem:[#allocation2 + $0xc8] sm:$0xff]
    %v1505 = vld [vmem:[#allocation2 + $0xd0] sm:$0xff]
    %v1506 = vld [vmem:[#allocation2 + $0xd8] sm:$0xff]
    %1507 = vmatprep.subr.mxu0 %v436
    %1508 = vmatpush1.msra.mxu0 %v435
    %1509 = vmatprep.subr.mxu0 %v440
    %1510 = vmatpush1.msra.mxu0 %v439
    %1511 = vmatprep.subr.mxu0 %v444
    %1512 = vmatpush1.msra.mxu0 %v443
    %1513 = vmatprep.subr.mxu0 %v448
    %1514 = vmatpush1.msra.mxu0 %v447
    %1515 = vmatprep.subr.mxu0 %v452
    %1516 = vmatpush1.msra.mxu0 %v451
    %1517 = vmatprep.subr.mxu0 %v456
    %1518 = vmatpush1.msra.mxu0 %v455
    %1519 = vmatprep.subr.mxu0 %v460
    %1520 = vmatpush1.msra.mxu0 %v459
    %1521 = vmatprep.subr.mxu0 %v464
    %1522 = vmatpush1.msra.mxu0 %v463
    %1523 = vmatprep.subr.mxu0 %v468
    %1524 = vmatpush1.msra.mxu0 %v467
    %1525 = vmatprep.subr.mxu0 %v472
    %1526 = vmatpush1.msra.mxu0 %v471
    %1527 = vmatprep.subr.mxu0 %v476
    %1528 = vmatpush1.msra.mxu0 %v475
    %1529 = vmatprep.subr.mxu0 %v480
    %1530 = vmatpush1.msra.mxu0 %v479
    %1531 = vmatprep.subr.mxu0 %v484
    %1532 = vmatpush1.msra.mxu0 %v483
    %1533 = vmatprep.subr.mxu0 %v488
    %1534 = vmatpush1.msra.mxu0 %v487
    %1535 = vmatprep.subr.mxu0 %v492
    %1536 = vmatpush1.msra.mxu0 %v491
    %1537 = vmatprep.subr.mxu0 %v496
    %1538 = vmatpush1.msra.mxu0 %v495
    %1539 = vmatprep.subr.mxu0 0.0
    %1540 = vmatpush1.msra.mxu0 0.0
    %1541 = vmatprep.subr.mxu0 0.0
    %1542 = vmatpush1.msra.mxu0 0.0
    %1543 = vmatprep.subr.mxu0 0.0
    %1544 = vmatpush1.msra.mxu0 0.0
    %1545 = vmatprep.subr.mxu0 0.0
    %1546 = vmatpush1.msra.mxu0 0.0
    %1547 = vmatprep.subr.mxu0 0.0
    %1548 = vmatpush1.msra.mxu0 0.0
    %1549 = vmatprep.subr.mxu0 0.0
    %1550 = vmatpush1.msra.mxu0 0.0
    %1551 = vmatprep.subr.mxu0 0.0
    %1552 = vmatpush1.msra.mxu0 0.0
    %1553 = vmatprep.subr.mxu0 0.0
    %1554 = vmatpush1.msra.mxu0 0.0
    %1555 = vmatprep.subr.mxu0 0.0
    %1556 = vmatpush1.msra.mxu0 0.0
    %1557 = vmatprep.subr.mxu0 0.0
    %1558 = vmatpush1.msra.mxu0 0.0
    %1559 = vmatprep.subr.mxu0 0.0
    %1560 = vmatpush1.msra.mxu0 0.0
    %1561 = vmatprep.subr.mxu0 0.0
    %1562 = vmatpush1.msra.mxu0 0.0
    %1563 = vmatprep.subr.mxu0 0.0
    %1564 = vmatpush1.msra.mxu0 0.0
    %1565 = vmatprep.subr.mxu0 0.0
    %1566 = vmatpush1.msra.mxu0 0.0
    %1567 = vmatprep.subr.mxu0 0.0
    %1568 = vmatpush1.msra.mxu0 0.0
    %1569 = vmatprep.subr.mxu0 0.0
    %1570 = vmatpush1.msra.mxu0 0.0
    %1571 = vmatprep.mubr.f32.mxu0 0.0
    %1572 = vmatmul.mubr.f32.gmra.mrb[0].mxu0 %v1502
    %v1573 = vpop.f32.mrb[0].mxu0
    %v1574 = vadd.f32 0.0, %v1573
    %v1575 = vpop.f32.mrb[0].mxu0
    %v1576 = vadd.f32 0.0, %v1575
    %1577 = vdwg.mxu0
    %1578 = vmatprep.subr.mxu0 %v438
    %1579 = vmatpush1.msra.mxu0 %v437
    %1580 = vmatprep.subr.mxu0 %v442
    %1581 = vmatpush1.msra.mxu0 %v441
    %1582 = vmatprep.subr.mxu0 %v446
    %1583 = vmatpush1.msra.mxu0 %v445
    %1584 = vmatprep.subr.mxu0 %v450
    %1585 = vmatpush1.msra.mxu0 %v449
    %1586 = vmatprep.subr.mxu0 %v454
    %1587 = vmatpush1.msra.mxu0 %v453
    %1588 = vmatprep.subr.mxu0 %v458
    %1589 = vmatpush1.msra.mxu0 %v457
    %1590 = vmatprep.subr.mxu0 %v462
    %1591 = vmatpush1.msra.mxu0 %v461
    %1592 = vmatprep.subr.mxu0 %v466
    %1593 = vmatpush1.msra.mxu0 %v465
    %1594 = vmatprep.subr.mxu0 %v470
    %1595 = vmatpush1.msra.mxu0 %v469
    %1596 = vmatprep.subr.mxu0 %v474
    %1597 = vmatpush1.msra.mxu0 %v473
    %1598 = vmatprep.subr.mxu0 %v478
    %1599 = vmatpush1.msra.mxu0 %v477
    %1600 = vmatprep.subr.mxu0 %v482
    %1601 = vmatpush1.msra.mxu0 %v481
    %1602 = vmatprep.subr.mxu0 %v486
    %1603 = vmatpush1.msra.mxu0 %v485
    %1604 = vmatprep.subr.mxu0 %v490
    %1605 = vmatpush1.msra.mxu0 %v489
    %1606 = vmatprep.subr.mxu0 %v494
    %1607 = vmatpush1.msra.mxu0 %v493
    %1608 = vmatprep.subr.mxu0 %v498
    %1609 = vmatpush1.msra.mxu0 %v497
    %1610 = vmatprep.subr.mxu0 0.0
    %1611 = vmatpush1.msra.mxu0 0.0
    %1612 = vmatprep.subr.mxu0 0.0
    %1613 = vmatpush1.msra.mxu0 0.0
    %1614 = vmatprep.subr.mxu0 0.0
    %1615 = vmatpush1.msra.mxu0 0.0
    %1616 = vmatprep.subr.mxu0 0.0
    %1617 = vmatpush1.msra.mxu0 0.0
    %1618 = vmatprep.subr.mxu0 0.0
    %1619 = vmatpush1.msra.mxu0 0.0
    %1620 = vmatprep.subr.mxu0 0.0
    %1621 = vmatpush1.msra.mxu0 0.0
    %1622 = vmatprep.subr.mxu0 0.0
    %1623 = vmatpush1.msra.mxu0 0.0
    %1624 = vmatprep.subr.mxu0 0.0
    %1625 = vmatpush1.msra.mxu0 0.0
    %1626 = vmatprep.subr.mxu0 0.0
    %1627 = vmatpush1.msra.mxu0 0.0
    %1628 = vmatprep.subr.mxu0 0.0
    %1629 = vmatpush1.msra.mxu0 0.0
    %1630 = vmatprep.subr.mxu0 0.0
    %1631 = vmatpush1.msra.mxu0 0.0
    %1632 = vmatprep.subr.mxu0 0.0
    %1633 = vmatpush1.msra.mxu0 0.0
    %1634 = vmatprep.subr.mxu0 0.0
    %1635 = vmatpush1.msra.mxu0 0.0
    %1636 = vmatprep.subr.mxu0 0.0
    %1637 = vmatpush1.msra.mxu0 0.0
    %1638 = vmatprep.subr.mxu0 0.0
    %1639 = vmatpush1.msra.mxu0 0.0
    %1640 = vmatprep.subr.mxu0 0.0
    %1641 = vmatpush1.msra.mxu0 0.0
    %1642 = vmatprep.mubr.f32.mxu0 0.0
    %1643 = vmatmul.mubr.f32.gmra.mrb[0].mxu0 %v1502
    %v1644 = vpop.f32.mrb[0].mxu0
    %v1645 = vadd.f32 0.0, %v1644
    %v1646 = vpop.f32.mrb[0].mxu0
    %v1647 = vadd.f32 0.0, %v1646
    %1648 = vdwg.mxu0
    %v1649 = vadd.f32 %v1503, %v1574
    %v1650 = vadd.f32 %v1504, %v1576
    %v1651 = vadd.f32 %v1505, %v1645
    %v1652 = vadd.f32 %v1506, %v1647
    %v1653 = vmul.f32 %v1649, 0.5
    %v1654 = vtanh.pop %v1653
    %v1655 = vmul.f32 %v1654, 0.5
    %v1656 = vadd.f32 %v1655, 0.5
    %v1657 = vmul.f32 %v1650, 0.5
    %v1658 = vtanh.pop %v1657
    %v1659 = vmul.f32 %v1658, 0.5
    %v1660 = vadd.f32 %v1659, 0.5
    %v1661 = vtanh.pop %v1651
    %v1662 = vmul.f32 %v1652, 0.5
    %v1663 = vtanh.pop %v1662
    %v1664 = vmul.f32 %v1663, 0.5
    %v1665 = vadd.f32 %v1664, 0.5
    %v1666 = vmul.f32 %v1660, %v1500
    %v1667 = vmul.f32 %v1656, %v1661
    %v1668 = vadd.f32 %v1666, %v1667
    %v1669 = vtanh.pop %v1668
    %v1670 = vmul.f32 %v1665, %v1669
    %v1671 = vld [vmem:[#allocation2 + $0xe0] sm:$0xff]
    %v1672 = vld [vmem:[#allocation2 + $0xe8] sm:$0xff]
    %v1673 = vld [vmem:[#allocation2 + $0xf0] sm:$0xff]
    %v1674 = vld [vmem:[#allocation2 + $0xf8] sm:$0xff]
    %1675 = vmatprep.subr.mxu0 %v436
    %1676 = vmatpush1.msra.mxu0 %v435
    %1677 = vmatprep.subr.mxu0 %v440
    %1678 = vmatpush1.msra.mxu0 %v439
    %1679 = vmatprep.subr.mxu0 %v444
    %1680 = vmatpush1.msra.mxu0 %v443
    %1681 = vmatprep.subr.mxu0 %v448
    %1682 = vmatpush1.msra.mxu0 %v447
    %1683 = vmatprep.subr.mxu0 %v452
    %1684 = vmatpush1.msra.mxu0 %v451
    %1685 = vmatprep.subr.mxu0 %v456
    %1686 = vmatpush1.msra.mxu0 %v455
    %1687 = vmatprep.subr.mxu0 %v460
    %1688 = vmatpush1.msra.mxu0 %v459
    %1689 = vmatprep.subr.mxu0 %v464
    %1690 = vmatpush1.msra.mxu0 %v463
    %1691 = vmatprep.subr.mxu0 %v468
    %1692 = vmatpush1.msra.mxu0 %v467
    %1693 = vmatprep.subr.mxu0 %v472
    %1694 = vmatpush1.msra.mxu0 %v471
    %1695 = vmatprep.subr.mxu0 %v476
    %1696 = vmatpush1.msra.mxu0 %v475
    %1697 = vmatprep.subr.mxu0 %v480
    %1698 = vmatpush1.msra.mxu0 %v479
    %1699 = vmatprep.subr.mxu0 %v484
    %1700 = vmatpush1.msra.mxu0 %v483
    %1701 = vmatprep.subr.mxu0 %v488
    %1702 = vmatpush1.msra.mxu0 %v487
    %1703 = vmatprep.subr.mxu0 %v492
    %1704 = vmatpush1.msra.mxu0 %v491
    %1705 = vmatprep.subr.mxu0 %v496
    %1706 = vmatpush1.msra.mxu0 %v495
    %1707 = vmatprep.subr.mxu0 0.0
    %1708 = vmatpush1.msra.mxu0 0.0
    %1709 = vmatprep.subr.mxu0 0.0
    %1710 = vmatpush1.msra.mxu0 0.0
    %1711 = vmatprep.subr.mxu0 0.0
    %1712 = vmatpush1.msra.mxu0 0.0
    %1713 = vmatprep.subr.mxu0 0.0
    %1714 = vmatpush1.msra.mxu0 0.0
    %1715 = vmatprep.subr.mxu0 0.0
    %1716 = vmatpush1.msra.mxu0 0.0
    %1717 = vmatprep.subr.mxu0 0.0
    %1718 = vmatpush1.msra.mxu0 0.0
    %1719 = vmatprep.subr.mxu0 0.0
    %1720 = vmatpush1.msra.mxu0 0.0
    %1721 = vmatprep.subr.mxu0 0.0
    %1722 = vmatpush1.msra.mxu0 0.0
    %1723 = vmatprep.subr.mxu0 0.0
    %1724 = vmatpush1.msra.mxu0 0.0
    %1725 = vmatprep.subr.mxu0 0.0
    %1726 = vmatpush1.msra.mxu0 0.0
    %1727 = vmatprep.subr.mxu0 0.0
    %1728 = vmatpush1.msra.mxu0 0.0
    %1729 = vmatprep.subr.mxu0 0.0
    %1730 = vmatpush1.msra.mxu0 0.0
    %1731 = vmatprep.subr.mxu0 0.0
    %1732 = vmatpush1.msra.mxu0 0.0
    %1733 = vmatprep.subr.mxu0 0.0
    %1734 = vmatpush1.msra.mxu0 0.0
    %1735 = vmatprep.subr.mxu0 0.0
    %1736 = vmatpush1.msra.mxu0 0.0
    %1737 = vmatprep.subr.mxu0 0.0
    %1738 = vmatpush1.msra.mxu0 0.0
    %1739 = vmatprep.mubr.f32.mxu0 0.0
    %1740 = vmatmul.mubr.f32.gmra.mrb[0].mxu0 %v1670
    %v1741 = vpop.f32.mrb[0].mxu0
    %v1742 = vadd.f32 0.0, %v1741
    %v1743 = vpop.f32.mrb[0].mxu0
    %v1744 = vadd.f32 0.0, %v1743
    %1745 = vdwg.mxu0
    %1746 = vmatprep.subr.mxu0 %v438
    %1747 = vmatpush1.msra.mxu0 %v437
    %1748 = vmatprep.subr.mxu0 %v442
    %1749 = vmatpush1.msra.mxu0 %v441
    %1750 = vmatprep.subr.mxu0 %v446
    %1751 = vmatpush1.msra.mxu0 %v445
    %1752 = vmatprep.subr.mxu0 %v450
    %1753 = vmatpush1.msra.mxu0 %v449
    %1754 = vmatprep.subr.mxu0 %v454
    %1755 = vmatpush1.msra.mxu0 %v453
    %1756 = vmatprep.subr.mxu0 %v458
    %1757 = vmatpush1.msra.mxu0 %v457
    %1758 = vmatprep.subr.mxu0 %v462
    %1759 = vmatpush1.msra.mxu0 %v461
    %1760 = vmatprep.subr.mxu0 %v466
    %1761 = vmatpush1.msra.mxu0 %v465
    %1762 = vmatprep.subr.mxu0 %v470
    %1763 = vmatpush1.msra.mxu0 %v469
    %1764 = vmatprep.subr.mxu0 %v474
    %1765 = vmatpush1.msra.mxu0 %v473
    %1766 = vmatprep.subr.mxu0 %v478
    %1767 = vmatpush1.msra.mxu0 %v477
    %1768 = vmatprep.subr.mxu0 %v482
    %1769 = vmatpush1.msra.mxu0 %v481
    %1770 = vmatprep.subr.mxu0 %v486
    %1771 = vmatpush1.msra.mxu0 %v485
    %1772 = vmatprep.subr.mxu0 %v490
    %1773 = vmatpush1.msra.mxu0 %v489
    %1774 = vmatprep.subr.mxu0 %v494
    %1775 = vmatpush1.msra.mxu0 %v493
    %1776 = vmatprep.subr.mxu0 %v498
    %1777 = vmatpush1.msra.mxu0 %v497
    %1778 = vmatprep.subr.mxu0 0.0
    %1779 = vmatpush1.msra.mxu0 0.0
    %1780 = vmatprep.subr.mxu0 0.0
    %1781 = vmatpush1.msra.mxu0 0.0
    %1782 = vmatprep.subr.mxu0 0.0
    %1783 = vmatpush1.msra.mxu0 0.0
    %1784 = vmatprep.subr.mxu0 0.0
    %1785 = vmatpush1.msra.mxu0 0.0
    %1786 = vmatprep.subr.mxu0 0.0
    %1787 = vmatpush1.msra.mxu0 0.0
    %1788 = vmatprep.subr.mxu0 0.0
    %1789 = vmatpush1.msra.mxu0 0.0
    %1790 = vmatprep.subr.mxu0 0.0
    %1791 = vmatpush1.msra.mxu0 0.0
    %1792 = vmatprep.subr.mxu0 0.0
    %1793 = vmatpush1.msra.mxu0 0.0
    %1794 = vmatprep.subr.mxu0 0.0
    %1795 = vmatpush1.msra.mxu0 0.0
    %1796 = vmatprep.subr.mxu0 0.0
    %1797 = vmatpush1.msra.mxu0 0.0
    %1798 = vmatprep.subr.mxu0 0.0
    %1799 = vmatpush1.msra.mxu0 0.0
    %1800 = vmatprep.subr.mxu0 0.0
    %1801 = vmatpush1.msra.mxu0 0.0
    %1802 = vmatprep.subr.mxu0 0.0
    %1803 = vmatpush1.msra.mxu0 0.0
    %1804 = vmatprep.subr.mxu0 0.0
    %1805 = vmatpush1.msra.mxu0 0.0
    %1806 = vmatprep.subr.mxu0 0.0
    %1807 = vmatpush1.msra.mxu0 0.0
    %1808 = vmatprep.subr.mxu0 0.0
    %1809 = vmatpush1.msra.mxu0 0.0
    %1810 = vmatprep.mubr.f32.mxu0 0.0
    %1811 = vmatmul.mubr.f32.gmra.mrb[0].mxu0 %v1670
    %v1812 = vpop.f32.mrb[0].mxu0
    %v1813 = vadd.f32 0.0, %v1812
    %v1814 = vpop.f32.mrb[0].mxu0
    %v1815 = vadd.f32 0.0, %v1814
    %1816 = vdwg.mxu0
    %v1817 = vadd.f32 %v1671, %v1742
    %v1818 = vadd.f32 %v1672, %v1744
    %v1819 = vadd.f32 %v1673, %v1813
    %v1820 = vadd.f32 %v1674, %v1815
    %v1821 = vmul.f32 %v1817, 0.5
    %v1822 = vtanh.pop %v1821
    %v1823 = vmul.f32 %v1822, 0.5
    %v1824 = vadd.f32 %v1823, 0.5
    %v1825 = vmul.f32 %v1818, 0.5
    %v1826 = vtanh.pop %v1825
    %v1827 = vmul.f32 %v1826, 0.5
    %v1828 = vadd.f32 %v1827, 0.5
    %v1829 = vtanh.pop %v1819
    %v1830 = vmul.f32 %v1820, 0.5
    %v1831 = vtanh.pop %v1830
    %v1832 = vmul.f32 %v1831, 0.5
    %v1833 = vadd.f32 %v1832, 0.5
    %v1834 = vmul.f32 %v1828, %v1668
    %v1835 = vmul.f32 %v1824, %v1829
    %v1836 = vadd.f32 %v1834, %v1835
    %v1837 = vtanh.pop %v1836
    %v1838 = vmul.f32 %v1833, %v1837
    %v1839 = vld [vmem:[#allocation9] sm:$0xff]
    %v1840 = vld [vmem:[#allocation9 + $0x8] sm:$0xff]
    %v1841 = vld [vmem:[#allocation9 + $0x10] sm:$0xff]
    %v1842 = vld [vmem:[#allocation9 + $0x18] sm:$0xff]
    %v1843 = vld [vmem:[#allocation9 + $0x20] sm:$0xff]
    %v1844 = vld [vmem:[#allocation9 + $0x28] sm:$0xff]
    %v1845 = vld [vmem:[#allocation9 + $0x30] sm:$0xff]
    %v1846 = vld [vmem:[#allocation9 + $0x38] sm:$0xff]
    %v1847 = vld [vmem:[#allocation9 + $0x40] sm:$0xff]
    %v1848 = vld [vmem:[#allocation9 + $0x48] sm:$0xff]
    %v1849 = vld [vmem:[#allocation9 + $0x50] sm:$0xff]
    %v1850 = vld [vmem:[#allocation9 + $0x58] sm:$0xff]
    %v1851 = vld [vmem:[#allocation9 + $0x60] sm:$0xff]
    %v1852 = vld [vmem:[#allocation9 + $0x68] sm:$0xff]
    %v1853 = vld [vmem:[#allocation9 + $0x70] sm:$0xff]
    %v1854 = vld [vmem:[#allocation9 + $0x78] sm:$0xff]
    %v1855 = vld [vmem:[%s5] sm:$0x1]
    %v1857 = vlaneseq
    %v1858 = vshrl.u32 %v1857, 7
    %v1859 = vsub.s32 0, %v1858
    %v1860 = vrot.slane %v1855, %v1859
    %1862 = vmatprep.subr.mxu0 0.0
    %1863 = vmatpush1.msra.mxu0 %v1839
    %1864 = vmatprep.subr.mxu0 0.0
    %1865 = vmatpush1.msra.mxu0 %v1840
    %1866 = vmatprep.subr.mxu0 0.0
    %1867 = vmatpush1.msra.mxu0 %v1841
    %1868 = vmatprep.subr.mxu0 0.0
    %1869 = vmatpush1.msra.mxu0 %v1842
    %1870 = vmatprep.subr.mxu0 0.0
    %1871 = vmatpush1.msra.mxu0 %v1843
    %1872 = vmatprep.subr.mxu0 0.0
    %1873 = vmatpush1.msra.mxu0 %v1844
    %1874 = vmatprep.subr.mxu0 0.0
    %1875 = vmatpush1.msra.mxu0 %v1845
    %1876 = vmatprep.subr.mxu0 0.0
    %1877 = vmatpush1.msra.mxu0 %v1846
    %1878 = vmatprep.subr.mxu0 0.0
    %1879 = vmatpush1.msra.mxu0 %v1847
    %1880 = vmatprep.subr.mxu0 0.0
    %1881 = vmatpush1.msra.mxu0 %v1848
    %1882 = vmatprep.subr.mxu0 0.0
    %1883 = vmatpush1.msra.mxu0 %v1849
    %1884 = vmatprep.subr.mxu0 0.0
    %1885 = vmatpush1.msra.mxu0 %v1850
    %1886 = vmatprep.subr.mxu0 0.0
    %1887 = vmatpush1.msra.mxu0 %v1851
    %1888 = vmatprep.subr.mxu0 0.0
    %1889 = vmatpush1.msra.mxu0 %v1852
    %1890 = vmatprep.subr.mxu0 0.0
    %1891 = vmatpush1.msra.mxu0 %v1853
    %1892 = vmatprep.subr.mxu0 0.0
    %1893 = vmatpush1.msra.mxu0 %v1854
    %1894 = vmatprep.subr.mxu0 0.0
    %1895 = vmatpush1.msra.mxu0 0.0
    %1896 = vmatprep.subr.mxu0 0.0
    %1897 = vmatpush1.msra.mxu0 0.0
    %1898 = vmatprep.subr.mxu0 0.0
    %1899 = vmatpush1.msra.mxu0 0.0
    %1900 = vmatprep.subr.mxu0 0.0
    %1901 = vmatpush1.msra.mxu0 0.0
    %1902 = vmatprep.subr.mxu0 0.0
    %1903 = vmatpush1.msra.mxu0 0.0
    %1904 = vmatprep.subr.mxu0 0.0
    %1905 = vmatpush1.msra.mxu0 0.0
    %1906 = vmatprep.subr.mxu0 0.0
    %1907 = vmatpush1.msra.mxu0 0.0
    %1908 = vmatprep.subr.mxu0 0.0
    %1909 = vmatpush1.msra.mxu0 0.0
    %1910 = vmatprep.subr.mxu0 0.0
    %1911 = vmatpush1.msra.mxu0 0.0
    %1912 = vmatprep.subr.mxu0 0.0
    %1913 = vmatpush1.msra.mxu0 0.0
    %1914 = vmatprep.subr.mxu0 0.0
    %1915 = vmatpush1.msra.mxu0 0.0
    %1916 = vmatprep.subr.mxu0 0.0
    %1917 = vmatpush1.msra.mxu0 0.0
    %1918 = vmatprep.subr.mxu0 0.0
    %1919 = vmatpush1.msra.mxu0 0.0
    %1920 = vmatprep.subr.mxu0 0.0
    %1921 = vmatpush1.msra.mxu0 0.0
    %1922 = vmatprep.subr.mxu0 0.0
    %1923 = vmatpush1.msra.mxu0 0.0
    %1924 = vmatprep.subr.mxu0 0.0
    %1925 = vmatpush1.msra.mxu0 0.0
    %1926 = vmatprep.mubr.f32.mxu0 0.0
    %1927 = vmatmul.mubr.f32.gmra.mrb[0].mxu0 %v1838
    %v1928 = vpop.f32.mrb[0].mxu0
    %v1929 = vadd.f32 %v1860, %v1928
    %v1930 = vpop.f32.mrb[0].mxu0
    %1931 = vdwg.mxu0
    %1932 = vst [vmem:[#allocation11] sm:$0xff] %v1929
    // Predicated region
    $region42: #{tpu_custom_call.1} parent=1 // pred_check
      _
    $region43: #{tpu_custom_call.1} parent=1 // pred_check_branch
      %1934 = sbr.rel (0) target = $region45
    $region44: #{tpu_custom_call.1} parent=1 // pred_region
      %s1936 = ssub.s32 128, 128
      %1937 = vsyncadd [#allocation5], %s1936
      %s1939 = sshll.u32 [#allocation11], 4
      %s1940 = int_to_ptr.vmem [resolvable:$true] %s1939
      %1942 = dma.vmem_to_hbm [thread:$0]  %s1940, 128, %s6, [#allocation5]
    $region45: #{tpu_custom_call.1} parent=1 // pred_fallthru
      _
    // Predicated region
    $region46: #{tpu_custom_call.1} parent=1 // pred_check
      _
    $region47: #{tpu_custom_call.1} parent=1 // pred_check_branch
      %1944 = sbr.rel (0) target = $region49
    $region48: #{tpu_custom_call.1} parent=1 // pred_region
      %1945 = dma.done [#allocation5], 128
    $region49: #{tpu_custom_call.1} parent=1 // pred_fallthru
      _
    %1946 = vsyncpa [#allocation4], 1
    %1947 = vsyncpa [#allocation7], 1
    %1948 = vsyncpa [#allocation10], 1
    %1949 = vsyncpa [#allocation5], 1

</llo_original>
